<compile_context>
chip_gen: v6e
topology: v6e:2x2x1
jax: 0.10.0
libtpu: 0.0.40
codegen_flags: <defaults>
</compile_context>

<pallas_src>
import functools

import jax
import jax.numpy as jnp
from jax import lax
from jax.experimental import pallas as pl
from jax.experimental.pallas import tpu as pltpu

LANE = 128      # lane width — feature dims are padded to multiples of this
K_TILE = 256    # contraction tile for the backbone matmul


def _round_up(n, m):
    return ((n + m - 1) // m) * m


def _vicreg_kernel(xy_ref, wb_ref, bb_ref, w1_ref, b1_ref, g1_ref, be1_ref,
                   w2_ref, loss_ref, h0_acc, *,
                   batch, batch_size, num_features, f_pad,
                   sim_coeff, std_coeff, cov_coeff):
    k = pl.program_id(0)           # backbone contraction tile
    nk = pl.num_programs(0)
    B = batch

    # ---- backbone Linear: accumulate [x;y] @ Wb over D_in tiles (P1+P3) ----
    @pl.when(k == 0)
    def _():
        h0_acc[...] = jnp.zeros_like(h0_acc)

    h0_acc[...] += jnp.dot(xy_ref[...], wb_ref[...],
                           preferred_element_type=jnp.float32)

    # ---- projector head + VICReg loss on the last K tile -------------------
    @pl.when(k == nk - 1)
    def _():
        h0 = h0_acc[...] + bb_ref[...]                       # [2B, E_pad] f32

        # projector Linear 1 (bf16 MXU inputs, f32 accumulation)
        h = jnp.dot(h0.astype(jnp.bfloat16), w1_ref[...],
                    preferred_element_type=jnp.float32) + b1_ref[...]

        gamma = g1_ref[...]
        beta = be1_ref[...]

        def head(a):
            # BatchNorm1d (training mode: biased batch stats, eps=1e-5),
            # computed per view to match two separate projector calls.
            mu = jnp.mean(a, axis=0, keepdims=True)
            var = jnp.mean((a - mu) * (a - mu), axis=0, keepdims=True)
            a = (a - mu) * lax.rsqrt(var + 1e-5) * gamma + beta
            a = jnp.maximum(a, 0.0)                          # ReLU
            # projector final Linear (no bias)
            return jnp.dot(a.astype(jnp.bfloat16), w2_ref[...],
                           preferred_element_type=jnp.float32)

        zx = head(h[:B])                                     # [B, F_pad] f32
        zy = head(h[B:])

        # invariance term: F.mse_loss (padded columns are exactly zero)
        d = zx - zy
        repr_loss = jnp.sum(d * d) / (B * num_features)

        # centering (FullGatherLayer is identity at world_size == 1)
        xm = zx - jnp.mean(zx, axis=0, keepdims=True)
        ym = zy - jnp.mean(zy, axis=0, keepdims=True)

        sumsq_x = jnp.sum(xm * xm, axis=0, keepdims=True)
        sumsq_y = jnp.sum(ym * ym, axis=0, keepdims=True)

        # variance term: torch.var(dim=0) is unbiased over the batch rows
        std_x = jnp.sqrt(sumsq_x / (B - 1) + 1e-4)
        std_y = jnp.sqrt(sumsq_y / (B - 1) + 1e-4)

        # mask padded feature columns (their std is 0, not a real feature)
        col = lax.broadcasted_iota(jnp.int32, (1, f_pad), 1)
        fmask = (col < num_features).astype(jnp.float32)
        std_loss = (jnp.sum(jnp.maximum(1.0 - std_x, 0.0) * fmask) +
                    jnp.sum(jnp.maximum(1.0 - std_y, 0.0) * fmask)
                    ) / (2.0 * num_features)

        # covariance term: off-diag^2 sum = sum(cov^2) - sum(diag^2),
        # diag(cov) = per-feature sum of squares / (batch_size - 1).
        diag_x = sumsq_x / (batch_size - 1)
        diag_y = sumsq_y / (batch_size - 1)
        cov_x = lax.dot_general(xm, xm, (((0,), (0,)), ((), ())),
                                preferred_element_type=jnp.float32)
        cov_y = lax.dot_general(ym, ym, (((0,), (0,)), ((), ())),
                                preferred_element_type=jnp.float32)
        cov_x = cov_x / (batch_size - 1)
        cov_y = cov_y / (batch_size - 1)
        cov_loss = ((jnp.sum(cov_x * cov_x) - jnp.sum(diag_x * diag_x)) +
                    (jnp.sum(cov_y * cov_y) - jnp.sum(diag_y * diag_y))
                    ) / num_features

        loss_ref[0, 0] = (sim_coeff * repr_loss + std_coeff * std_loss +
                          cov_coeff * cov_loss)


def vicreg_forward(x, y, params, *, sim_coeff, std_coeff, cov_coeff,
                   batch_size=None):
    B = x.shape[0]
    if batch_size is None:
        batch_size = B

    d_in, embedding = params["wb"].shape
    h1 = params["w1"].shape[1]
    num_features = params["w2"].shape[1]

    k_pad = _round_up(d_in, K_TILE)
    e_pad = _round_up(embedding, LANE)
    h_pad = _round_up(h1, LANE)
    f_pad = _round_up(num_features, LANE)

    # torch.flatten-style NCHW flatten; concatenate the two views along the
    # batch axis so the backbone / projector weights are DMA'd only once.
    xy = jnp.concatenate([x.reshape(B, -1), y.reshape(B, -1)], axis=0)
    xy = jnp.pad(xy.astype(jnp.float32),
                 ((0, 0), (0, k_pad - d_in))).astype(jnp.bfloat16)

    def pad2(a, r, c):
        return jnp.pad(a, ((0, r - a.shape[0]), (0, c - a.shape[1])))

    # zero-pad feature dims to lane-dense multiples of 128 (padded columns
    # stay exactly zero through the whole network — the loss corrects for
    # them with true-F divisors + a column mask).
    wb = pad2(params["wb"], k_pad, e_pad).astype(jnp.bfloat16)
    bb = pad2(params["bb"], 1, e_pad).astype(jnp.float32)
    w1 = pad2(params["w1"], e_pad, h_pad).astype(jnp.bfloat16)
    b1 = pad2(params["b1"], 1, h_pad).astype(jnp.float32)
    g1 = jnp.pad(params["g1"], ((0, 0), (0, h_pad - h1)),
                 constant_values=1.0).astype(jnp.float32)
    be1 = pad2(params["be1"], 1, h_pad).astype(jnp.float32)
    w2 = pad2(params["w2"], h_pad, f_pad).astype(jnp.bfloat16)

    nk = k_pad // K_TILE

    kernel = functools.partial(
        _vicreg_kernel,
        batch=B, batch_size=batch_size, num_features=num_features,
        f_pad=f_pad, sim_coeff=float(sim_coeff), std_coeff=float(std_coeff),
        cov_coeff=float(cov_coeff))

    flops = (2 * (2 * B) * (k_pad * e_pad + e_pad * h_pad + h_pad * f_pad)
             + 2 * 2 * B * f_pad * f_pad)
    bytes_accessed = (xy.size * 2 + wb.size * 2 + w1.size * 2 + w2.size * 2
                      + (bb.size + b1.size + g1.size + be1.size) * 4 + 4)
    cost = pl.CostEstimate(flops=flops,
                           transcendentals=2 * h_pad + 2 * f_pad,
                           bytes_accessed=bytes_accessed)

    out = pl.pallas_call(
        kernel,
        out_shape=jax.ShapeDtypeStruct((1, 1), jnp.float32),
        grid_spec=pltpu.PrefetchScalarGridSpec(
            num_scalar_prefetch=0,
            grid=(nk,),
            in_specs=[
                # stacked inputs: stream K tiles
                pl.BlockSpec((2 * B, K_TILE), lambda k: (0, k)),
                # backbone weight: stream K tiles
                pl.BlockSpec((K_TILE, e_pad), lambda k: (k, 0)),
                # biases / projector weights: constant index -> DMA'd once
                pl.BlockSpec((1, e_pad), lambda k: (0, 0)),
                pl.BlockSpec((e_pad, h_pad), lambda k: (0, 0)),
                pl.BlockSpec((1, h_pad), lambda k: (0, 0)),
                pl.BlockSpec((1, h_pad), lambda k: (0, 0)),
                pl.BlockSpec((1, h_pad), lambda k: (0, 0)),
                pl.BlockSpec((h_pad, f_pad), lambda k: (0, 0)),
            ],
            out_specs=pl.BlockSpec((1, 1), lambda k: (0, 0),
                                   memory_space=pltpu.MemorySpace.SMEM),
            scratch_shapes=[
                pltpu.VMEM((2 * B, e_pad), jnp.float32),   # backbone K-acc
            ],
        ),
        compiler_params=pltpu.CompilerParams(
            # K is a reduction axis carrying the accumulator -> "arbitrary".
            dimension_semantics=("arbitrary",),
            vmem_limit_bytes=32 * 1024 * 1024,
        ),
        cost_estimate=cost,
    )(xy, wb, bb, w1, b1, g1, be1, w2)
    return out[0, 0]


def vicreg_reference(x, y, params, *, sim_coeff, std_coeff, cov_coeff,
                     batch_size):
    """Pure-JAX f32 reference mirroring the PyTorch module (world_size=1)."""
    def branch(inp):
        h0 = inp.reshape(inp.shape[0], -1) @ params["wb"] + params["bb"]
        h = h0 @ params["w1"] + params["b1"]
        mu = jnp.mean(h, axis=0, keepdims=True)
        var = jnp.mean((h - mu) ** 2, axis=0, keepdims=True)
        h = (h - mu) / jnp.sqrt(var + 1e-5) * params["g1"] + params["be1"]
        h = jnp.maximum(h, 0.0)
        return h @ params["w2"]

    zx, zy = branch(x), branch(y)
    B, F = zx.shape
    repr_loss = jnp.mean((zx - zy) ** 2)
    xm = zx - zx.mean(0)
    ym = zy - zy.mean(0)
    std_x = jnp.sqrt(jnp.var(zx, axis=0, ddof=1) + 1e-4)
    std_y = jnp.sqrt(jnp.var(zy, axis=0, ddof=1) + 1e-4)
    std_loss = (jnp.mean(jnp.maximum(1.0 - std_x, 0.0)) / 2 +
                jnp.mean(jnp.maximum(1.0 - std_y, 0.0)) / 2)
    cov_x = xm.T @ xm / (batch_size - 1)
    cov_y = ym.T @ ym / (batch_size - 1)
    off = lambda c: jnp.sum(c ** 2) - jnp.sum(jnp.diag(c) ** 2)
    cov_loss = off(cov_x) / F + off(cov_y) / F
    return sim_coeff * repr_loss + std_coeff * std_loss + cov_coeff * cov_loss


def init_params(key, d_in, embedding, h1, num_features):
    ks = jax.random.split(key, 3)
    scale = 0.05
    return {
        # backbone linear (TODO(synk): stands in for the ResNet backbone)
        "wb": scale * jax.random.normal(ks[0], (d_in, embedding), jnp.float32),
        "bb": jnp.zeros((1, embedding), jnp.float32),
        # projector layer 1: Linear + BN(gamma=1, beta=0) + ReLU
        "w1": scale * jax.random.normal(ks[1], (embedding, h1), jnp.float32),
        "b1": 0.01 * jnp.ones((1, h1), jnp.float32),
        "g1": jnp.ones((1, h1), jnp.float32),
        "be1": jnp.zeros((1, h1), jnp.float32),
        # projector final Linear (no bias)
        "w2": scale * jax.random.normal(ks[2], (h1, num_features), jnp.float32),
    }


if __name__ == "__main__":
    # Small shapes consistent with the module: args.mlp = "32-16",
    # embedding = 32, batch_size = 2, input images [2, 4, 16, 16].
    B, C, H, W = 2, 4, 16, 16
    D_IN = C * H * W
    EMBEDDING, H1, NUM_FEATURES = 32, 32, 16
    SIM_COEFF, STD_COEFF, COV_COEFF = 25.0, 25.0, 1.0

    key = jax.random.PRNGKey(0)
    kx, ky, kp = jax.random.split(key, 3)
    x = jax.random.normal(kx, (B, C, H, W), jnp.float32)
    y = jax.random.normal(ky, (B, C, H, W), jnp.float32)
    params = init_params(kp, D_IN, EMBEDDING, H1, NUM_FEATURES)

    loss = vicreg_forward(x, y, params, sim_coeff=SIM_COEFF,
                          std_coeff=STD_COEFF, cov_coeff=COV_COEFF,
                          batch_size=B)
    jax.block_until_ready(loss)

    ref = vicreg_reference(x, y, params, sim_coeff=SIM_COEFF,
                           std_coeff=STD_COEFF, cov_coeff=COV_COEFF,
                           batch_size=B)
    assert jnp.isfinite(loss), "kernel produced non-finite loss"
    # bf16 MXU inputs -> allow a loose tolerance vs. the f32 reference
    assert abs(float(loss) - float(ref)) <= 1e-2 + 5e-2 * abs(float(ref)), (
        f"kernel {float(loss)} vs reference {float(ref)}")
    print("KERNEL_OK")
</pallas_src>

<mosaic_0001>
module attributes {stable_mosaic.version = 11 : i64} {
  func.func @_vicreg_kernel(%arg0: i32, %arg1: memref<4x256xbf16, #tpu.memory_space<vmem>>, %arg2: memref<256x128xbf16, #tpu.memory_space<vmem>>, %arg3: memref<1x128xf32, #tpu.memory_space<vmem>>, %arg4: memref<128x128xbf16, #tpu.memory_space<vmem>>, %arg5: memref<1x128xf32, #tpu.memory_space<vmem>>, %arg6: memref<1x128xf32, #tpu.memory_space<vmem>>, %arg7: memref<1x128xf32, #tpu.memory_space<vmem>>, %arg8: memref<128x128xbf16, #tpu.memory_space<vmem>>, %arg9: memref<1x1xf32, #tpu.memory_space<smem>>, %arg10: memref<4x128xf32, #tpu.memory_space<vmem>>) attributes {dimension_semantics = [#tpu.dimension_semantics<arbitrary>], iteration_bounds = array<i64: 4>, scalar_prefetch = 0 : i64, scratch_operands = 1 : i64, tpu.core_type = #tpu.core_type<tc>, window_params = [{transform_indices = @transform_0, window_bounds = array<i64: 4, 256>}, {transform_indices = @transform_1, window_bounds = array<i64: 256, 128>}, {pipeline_mode = #tpu.pipeline_mode<synchronous>, transform_indices = @transform_2, window_bounds = array<i64: 1, 128>}, {pipeline_mode = #tpu.pipeline_mode<synchronous>, transform_indices = @transform_3, window_bounds = array<i64: 128, 128>}, {pipeline_mode = #tpu.pipeline_mode<synchronous>, transform_indices = @transform_4, window_bounds = array<i64: 1, 128>}, {pipeline_mode = #tpu.pipeline_mode<synchronous>, transform_indices = @transform_5, window_bounds = array<i64: 1, 128>}, {pipeline_mode = #tpu.pipeline_mode<synchronous>, transform_indices = @transform_6, window_bounds = array<i64: 1, 128>}, {pipeline_mode = #tpu.pipeline_mode<synchronous>, transform_indices = @transform_7, window_bounds = array<i64: 128, 128>}, {transform_indices = @transform_8, window_bounds = array<i64: 1, 1>}]} {
    %c0_i32 = arith.constant 0 : i32
    %0 = arith.cmpi eq, %arg0, %c0_i32 : i32
    %1 = arith.extui %0 : i1 to i32
    %c0_i32_0 = arith.constant 0 : i32
    %2 = arith.cmpi ne, %1, %c0_i32_0 : i32
    scf.if %2 {
      %cst_9 = arith.constant 0.000000e+00 : f32
      %12 = vector.broadcast %cst_9 : f32 to vector<4x128xf32>
      %c0_10 = arith.constant 0 : index
      %c0_11 = arith.constant 0 : index
      %13 = vector.load %arg10[%c0_10, %c0_11] : memref<4x128xf32, #tpu.memory_space<vmem>>, vector<4x128xf32>
      tpu.vector_store %arg10[%c0_10, %c0_11], %12 {strides = array<i32>} : memref<4x128xf32, #tpu.memory_space<vmem>>, vector<4x128xf32>,
    } else {
    }
    %c0 = arith.constant 0 : index
    %c0_1 = arith.constant 0 : index
    %3 = vector.load %arg10[%c0, %c0_1] : memref<4x128xf32, #tpu.memory_space<vmem>>, vector<4x128xf32>
    %c0_2 = arith.constant 0 : index
    %c0_3 = arith.constant 0 : index
    %4 = vector.load %arg1[%c0_2, %c0_3] : memref<4x256xbf16, #tpu.memory_space<vmem>>, vector<4x256xbf16>
    %c0_4 = arith.constant 0 : index
    %c0_5 = arith.constant 0 : index
    %5 = vector.load %arg2[%c0_4, %c0_5] : memref<256x128xbf16, #tpu.memory_space<vmem>>, vector<256x128xbf16>
    %cst = arith.constant dense<0.000000e+00> : vector<4x128xf32>
    %6 = tpu.matmul %4, %5, %cst {dimension_numbers = #tpu.dot_dimension_numbers<[1], [0], [0], [1], [0, 0, 1, 1], [], []>} : vector<4x256xbf16>, vector<256x128xbf16>, vector<4x128xf32> -> vector<4x128xf32>
    %7 = arith.addf %3, %6 : vector<4x128xf32>
    %c0_6 = arith.constant 0 : index
    %c0_7 = arith.constant 0 : index
    %8 = vector.load %arg10[%c0_6, %c0_7] : memref<4x128xf32, #tpu.memory_space<vmem>>, vector<4x128xf32>
    tpu.vector_store %arg10[%c0_6, %c0_7], %7 {strides = array<i32>} : memref<4x128xf32, #tpu.memory_space<vmem>>, vector<4x128xf32>,
    %c3_i32 = arith.constant 3 : i32
    %9 = arith.cmpi eq, %arg0, %c3_i32 : i32
    %10 = arith.extui %9 : i1 to i32
    %c0_i32_8 = arith.constant 0 : i32
    %11 = arith.cmpi ne, %10, %c0_i32_8 : i32
    scf.if %11 {
      %c0_9 = arith.constant 0 : index
      %c0_10 = arith.constant 0 : index
      %12 = vector.load %arg10[%c0_9, %c0_10] : memref<4x128xf32, #tpu.memory_space<vmem>>, vector<4x128xf32>
      %c0_11 = arith.constant 0 : index
      %c0_12 = arith.constant 0 : index
      %13 = vector.load %arg3[%c0_11, %c0_12] : memref<1x128xf32, #tpu.memory_space<vmem>>, vector<1x128xf32>
      %14 = vector.broadcast %13 : vector<1x128xf32> to vector<4x128xf32>
      %15 = arith.addf %12, %14 : vector<4x128xf32>
      %16 = arith.truncf %15 : vector<4x128xf32> to vector<4x128xbf16>
      %c0_13 = arith.constant 0 : index
      %c0_14 = arith.constant 0 : index
      %17 = vector.load %arg4[%c0_13, %c0_14] : memref<128x128xbf16, #tpu.memory_space<vmem>>, vector<128x128xbf16>
      %cst_15 = arith.constant dense<0.000000e+00> : vector<4x128xf32>
      %18 = tpu.matmul %16, %17, %cst_15 {dimension_numbers = #tpu.dot_dimension_numbers<[1], [0], [0], [1], [0, 0, 1, 1], [], []>} : vector<4x128xbf16>, vector<128x128xbf16>, vector<4x128xf32> -> vector<4x128xf32>
      %c0_16 = arith.constant 0 : index
      %c0_17 = arith.constant 0 : index
      %19 = vector.load %arg5[%c0_16, %c0_17] : memref<1x128xf32, #tpu.memory_space<vmem>>, vector<1x128xf32>
      %20 = vector.broadcast %19 : vector<1x128xf32> to vector<4x128xf32>
      %21 = arith.addf %18, %20 : vector<4x128xf32>
      %c0_18 = arith.constant 0 : index
      %c0_19 = arith.constant 0 : index
      %22 = vector.load %arg6[%c0_18, %c0_19] : memref<1x128xf32, #tpu.memory_space<vmem>>, vector<1x128xf32>
      %c0_20 = arith.constant 0 : index
      %c0_21 = arith.constant 0 : index
      %23 = vector.load %arg7[%c0_20, %c0_21] : memref<1x128xf32, #tpu.memory_space<vmem>>, vector<1x128xf32>
      %24 = vector.extract_strided_slice %21 {offsets = [0, 0], sizes = [2, 128], strides = [1, 1]} : vector<4x128xf32> to vector<2x128xf32>
      %cst_22 = arith.constant dense<0.000000e+00> : vector<128xf32>
      %25 = vector.multi_reduction <add>, %24, %cst_22 [0] : vector<2x128xf32> to vector<128xf32>
      %26 = vector.shape_cast %25 : vector<128xf32> to vector<1x128xf32>
      %cst_23 = arith.constant 2.000000e+00 : f32
      %27 = vector.broadcast %cst_23 : f32 to vector<1x128xf32>
      %28 = arith.divf %26, %27 : vector<1x128xf32>
      %29 = vector.broadcast %28 : vector<1x128xf32> to vector<2x128xf32>
      %30 = arith.subf %24, %29 : vector<2x128xf32>
      %31 = vector.broadcast %28 : vector<1x128xf32> to vector<2x128xf32>
      %32 = arith.subf %24, %31 : vector<2x128xf32>
      %33 = arith.mulf %30, %32 : vector<2x128xf32>
      %cst_24 = arith.constant dense<0.000000e+00> : vector<128xf32>
      %34 = vector.multi_reduction <add>, %33, %cst_24 [0] : vector<2x128xf32> to vector<128xf32>
      %35 = vector.shape_cast %34 : vector<128xf32> to vector<1x128xf32>
      %cst_25 = arith.constant 2.000000e+00 : f32
      %36 = vector.broadcast %cst_25 : f32 to vector<1x128xf32>
      %37 = arith.divf %35, %36 : vector<1x128xf32>
      %38 = vector.broadcast %28 : vector<1x128xf32> to vector<2x128xf32>
      %39 = arith.subf %24, %38 : vector<2x128xf32>
      %cst_26 = arith.constant 9.99999974E-6 : f32
      %40 = vector.broadcast %cst_26 : f32 to vector<1x128xf32>
      %41 = arith.addf %37, %40 : vector<1x128xf32>
      %42 = math.rsqrt %41 : vector<1x128xf32>
      %43 = vector.broadcast %42 : vector<1x128xf32> to vector<2x128xf32>
      %44 = arith.mulf %39, %43 : vector<2x128xf32>
      %45 = vector.broadcast %22 : vector<1x128xf32> to vector<2x128xf32>
      %46 = arith.mulf %44, %45 : vector<2x128xf32>
      %47 = vector.broadcast %23 : vector<1x128xf32> to vector<2x128xf32>
      %48 = arith.addf %46, %47 : vector<2x128xf32>
      %cst_27 = arith.constant 0.000000e+00 : f32
      %49 = vector.broadcast %cst_27 : f32 to vector<2x128xf32>
      %50 = arith.maximumf %48, %49 : vector<2x128xf32>
      %51 = arith.truncf %50 : vector<2x128xf32> to vector<2x128xbf16>
      %c0_28 = arith.constant 0 : index
      %c0_29 = arith.constant 0 : index
      %52 = vector.load %arg8[%c0_28, %c0_29] : memref<128x128xbf16, #tpu.memory_space<vmem>>, vector<128x128xbf16>
      %cst_30 = arith.constant dense<0.000000e+00> : vector<2x128xf32>
      %53 = tpu.matmul %51, %52, %cst_30 {dimension_numbers = #tpu.dot_dimension_numbers<[1], [0], [0], [1], [0, 0, 1, 1], [], []>} : vector<2x128xbf16>, vector<128x128xbf16>, vector<2x128xf32> -> vector<2x128xf32>
      %54 = vector.extract_strided_slice %21 {offsets = [2, 0], sizes = [2, 128], strides = [1, 1]} : vector<4x128xf32> to vector<2x128xf32>
      %cst_31 = arith.constant dense<0.000000e+00> : vector<128xf32>
      %55 = vector.multi_reduction <add>, %54, %cst_31 [0] : vector<2x128xf32> to vector<128xf32>
      %56 = vector.shape_cast %55 : vector<128xf32> to vector<1x128xf32>
      %cst_32 = arith.constant 2.000000e+00 : f32
      %57 = vector.broadcast %cst_32 : f32 to vector<1x128xf32>
      %58 = arith.divf %56, %57 : vector<1x128xf32>
      %59 = vector.broadcast %58 : vector<1x128xf32> to vector<2x128xf32>
      %60 = arith.subf %54, %59 : vector<2x128xf32>
      %61 = vector.broadcast %58 : vector<1x128xf32> to vector<2x128xf32>
      %62 = arith.subf %54, %61 : vector<2x128xf32>
      %63 = arith.mulf %60, %62 : vector<2x128xf32>
      %cst_33 = arith.constant dense<0.000000e+00> : vector<128xf32>
      %64 = vector.multi_reduction <add>, %63, %cst_33 [0] : vector<2x128xf32> to vector<128xf32>
      %65 = vector.shape_cast %64 : vector<128xf32> to vector<1x128xf32>
      %cst_34 = arith.constant 2.000000e+00 : f32
      %66 = vector.broadcast %cst_34 : f32 to vector<1x128xf32>
      %67 = arith.divf %65, %66 : vector<1x128xf32>
      %68 = vector.broadcast %58 : vector<1x128xf32> to vector<2x128xf32>
      %69 = arith.subf %54, %68 : vector<2x128xf32>
      %cst_35 = arith.constant 9.99999974E-6 : f32
      %70 = vector.broadcast %cst_35 : f32 to vector<1x128xf32>
      %71 = arith.addf %67, %70 : vector<1x128xf32>
      %72 = math.rsqrt %71 : vector<1x128xf32>
      %73 = vector.broadcast %72 : vector<1x128xf32> to vector<2x128xf32>
      %74 = arith.mulf %69, %73 : vector<2x128xf32>
      %75 = vector.broadcast %22 : vector<1x128xf32> to vector<2x128xf32>
      %76 = arith.mulf %74, %75 : vector<2x128xf32>
      %77 = vector.broadcast %23 : vector<1x128xf32> to vector<2x128xf32>
      %78 = arith.addf %76, %77 : vector<2x128xf32>
      %cst_36 = arith.constant 0.000000e+00 : f32
      %79 = vector.broadcast %cst_36 : f32 to vector<2x128xf32>
      %80 = arith.maximumf %78, %79 : vector<2x128xf32>
      %81 = arith.truncf %80 : vector<2x128xf32> to vector<2x128xbf16>
      %c0_37 = arith.constant 0 : index
      %c0_38 = arith.constant 0 : index
      %82 = vector.load %arg8[%c0_37, %c0_38] : memref<128x128xbf16, #tpu.memory_space<vmem>>, vector<128x128xbf16>
      %cst_39 = arith.constant dense<0.000000e+00> : vector<2x128xf32>
      %83 = tpu.matmul %81, %82, %cst_39 {dimension_numbers = #tpu.dot_dimension_numbers<[1], [0], [0], [1], [0, 0, 1, 1], [], []>} : vector<2x128xbf16>, vector<128x128xbf16>, vector<2x128xf32> -> vector<2x128xf32>
      %84 = arith.subf %53, %83 : vector<2x128xf32>
      %85 = arith.mulf %84, %84 : vector<2x128xf32>
      %86 = vector.shape_cast %85 : vector<2x128xf32> to vector<1x2x128xf32>
      %cst_40 = arith.constant dense<0.000000e+00> : vector<1xf32>
      %87 = vector.multi_reduction <add>, %86, %cst_40 [1, 2] : vector<1x2x128xf32> to vector<1xf32>
      %88 = vector.shape_cast %87 : vector<1xf32> to vector<1x1x1xf32>
      %89 = vector.extract %88[0, 0, 0] : f32 from vector<1x1x1xf32>
      %cst_41 = arith.constant 3.200000e+01 : f32
      %90 = arith.divf %89, %cst_41 : f32
      %cst_42 = arith.constant dense<0.000000e+00> : vector<128xf32>
      %91 = vector.multi_reduction <add>, %53, %cst_42 [0] : vector<2x128xf32> to vector<128xf32>
      %92 = vector.shape_cast %91 : vector<128xf32> to vector<1x128xf32>
      %cst_43 = arith.constant 2.000000e+00 : f32
      %93 = vector.broadcast %cst_43 : f32 to vector<1x128xf32>
      %94 = arith.divf %92, %93 : vector<1x128xf32>
      %95 = vector.broadcast %94 : vector<1x128xf32> to vector<2x128xf32>
      %96 = arith.subf %53, %95 : vector<2x128xf32>
      %cst_44 = arith.constant dense<0.000000e+00> : vector<128xf32>
      %97 = vector.multi_reduction <add>, %83, %cst_44 [0] : vector<2x128xf32> to vector<128xf32>
      %98 = vector.shape_cast %97 : vector<128xf32> to vector<1x128xf32>
      %cst_45 = arith.constant 2.000000e+00 : f32
      %99 = vector.broadcast %cst_45 : f32 to vector<1x128xf32>
      %100 = arith.divf %98, %99 : vector<1x128xf32>
      %101 = vector.broadcast %100 : vector<1x128xf32> to vector<2x128xf32>
      %102 = arith.subf %83, %101 : vector<2x128xf32>
      %103 = arith.mulf %96, %96 : vector<2x128xf32>
      %cst_46 = arith.constant dense<0.000000e+00> : vector<128xf32>
      %104 = vector.multi_reduction <add>, %103, %cst_46 [0] : vector<2x128xf32> to vector<128xf32>
      %105 = vector.shape_cast %104 : vector<128xf32> to vector<1x128xf32>
      %106 = arith.mulf %102, %102 : vector<2x128xf32>
      %cst_47 = arith.constant dense<0.000000e+00> : vector<128xf32>
      %107 = vector.multi_reduction <add>, %106, %cst_47 [0] : vector<2x128xf32> to vector<128xf32>
      %108 = vector.shape_cast %107 : vector<128xf32> to vector<1x128xf32>
      %cst_48 = arith.constant 1.000000e+00 : f32
      %109 = vector.broadcast %cst_48 : f32 to vector<1x128xf32>
      %110 = arith.divf %105, %109 : vector<1x128xf32>
      %cst_49 = arith.constant 9.99999974E-5 : f32
      %111 = vector.broadcast %cst_49 : f32 to vector<1x128xf32>
      %112 = arith.addf %110, %111 : vector<1x128xf32>
      %113 = math.sqrt %112 : vector<1x128xf32>
      %cst_50 = arith.constant 1.000000e+00 : f32
      %114 = vector.broadcast %cst_50 : f32 to vector<1x128xf32>
      %115 = arith.divf %108, %114 : vector<1x128xf32>
      %cst_51 = arith.constant 9.99999974E-5 : f32
      %116 = vector.broadcast %cst_51 : f32 to vector<1x128xf32>
      %117 = arith.addf %115, %116 : vector<1x128xf32>
      %118 = math.sqrt %117 : vector<1x128xf32>
      %119 = tpu.iota {dimensions = array<i32: 1>} : vector<1x128xi32>
      %c16_i32 = arith.constant 16 : i32
      %120 = vector.broadcast %c16_i32 : i32 to vector<1x128xi32>
      %121 = arith.cmpi slt, %119, %120 : vector<1x128xi32>
      %122 = arith.extui %121 : vector<1x128xi1> to vector<1x128xi32>
      %123 = arith.sitofp %122 : vector<1x128xi32> to vector<1x128xf32>
      %cst_52 = arith.constant 1.000000e+00 : f32
      %124 = vector.broadcast %cst_52 : f32 to vector<1x128xf32>
      %125 = arith.subf %124, %113 : vector<1x128xf32>
      %cst_53 = arith.constant 0.000000e+00 : f32
      %126 = vector.broadcast %cst_53 : f32 to vector<1x128xf32>
      %127 = arith.maximumf %125, %126 : vector<1x128xf32>
      %128 = arith.mulf %127, %123 : vector<1x128xf32>
      %129 = vector.shape_cast %128 : vector<1x128xf32> to vector<1x1x128xf32>
      %cst_54 = arith.constant dense<0.000000e+00> : vector<1xf32>
      %130 = vector.multi_reduction <add>, %129, %cst_54 [1, 2] : vector<1x1x128xf32> to vector<1xf32>
      %131 = vector.shape_cast %130 : vector<1xf32> to vector<1x1x1xf32>
      %132 = vector.extract %131[0, 0, 0] : f32 from vector<1x1x1xf32>
      %cst_55 = arith.constant 1.000000e+00 : f32
      %133 = vector.broadcast %cst_55 : f32 to vector<1x128xf32>
      %134 = arith.subf %133, %118 : vector<1x128xf32>
      %cst_56 = arith.constant 0.000000e+00 : f32
      %135 = vector.broadcast %cst_56 : f32 to vector<1x128xf32>
      %136 = arith.maximumf %134, %135 : vector<1x128xf32>
      %137 = arith.mulf %136, %123 : vector<1x128xf32>
      %138 = vector.shape_cast %137 : vector<1x128xf32> to vector<1x1x128xf32>
      %cst_57 = arith.constant dense<0.000000e+00> : vector<1xf32>
      %139 = vector.multi_reduction <add>, %138, %cst_57 [1, 2] : vector<1x1x128xf32> to vector<1xf32>
      %140 = vector.shape_cast %139 : vector<1xf32> to vector<1x1x1xf32>
      %141 = vector.extract %140[0, 0, 0] : f32 from vector<1x1x1xf32>
      %142 = arith.addf %132, %141 : f32
      %cst_58 = arith.constant 3.200000e+01 : f32
      %143 = arith.divf %142, %cst_58 : f32
      %cst_59 = arith.constant 1.000000e+00 : f32
      %144 = vector.broadcast %cst_59 : f32 to vector<1x128xf32>
      %145 = arith.divf %105, %144 : vector<1x128xf32>
      %cst_60 = arith.constant 1.000000e+00 : f32
      %146 = vector.broadcast %cst_60 : f32 to vector<1x128xf32>
      %147 = arith.divf %108, %146 : vector<1x128xf32>
      %cst_61 = arith.constant dense<0.000000e+00> : vector<128x128xf32>
      %148 = tpu.matmul %96, %96, %cst_61 {dimension_numbers = #tpu.dot_dimension_numbers<[0], [0], [1], [1], [0, 1, 1, 1], [], []>} : vector<2x128xf32>, vector<2x128xf32>, vector<128x128xf32> -> vector<128x128xf32>
      %cst_62 = arith.constant dense<0.000000e+00> : vector<128x128xf32>
      %149 = tpu.matmul %102, %102, %cst_62 {dimension_numbers = #tpu.dot_dimension_numbers<[0], [0], [1], [1], [0, 1, 1, 1], [], []>} : vector<2x128xf32>, vector<2x128xf32>, vector<128x128xf32> -> vector<128x128xf32>
      %cst_63 = arith.constant 1.000000e+00 : f32
      %150 = vector.broadcast %cst_63 : f32 to vector<128x128xf32>
      %151 = arith.divf %148, %150 : vector<128x128xf32>
      %cst_64 = arith.constant 1.000000e+00 : f32
      %152 = vector.broadcast %cst_64 : f32 to vector<128x128xf32>
      %153 = arith.divf %149, %152 : vector<128x128xf32>
      %154 = arith.mulf %151, %151 : vector<128x128xf32>
      %155 = vector.shape_cast %154 : vector<128x128xf32> to vector<1x128x128xf32>
      %cst_65 = arith.constant dense<0.000000e+00> : vector<1xf32>
      %156 = vector.multi_reduction <add>, %155, %cst_65 [1, 2] : vector<1x128x128xf32> to vector<1xf32>
      %157 = vector.shape_cast %156 : vector<1xf32> to vector<1x1x1xf32>
      %158 = vector.extract %157[0, 0, 0] : f32 from vector<1x1x1xf32>
      %159 = arith.mulf %145, %145 : vector<1x128xf32>
      %160 = vector.shape_cast %159 : vector<1x128xf32> to vector<1x1x128xf32>
      %cst_66 = arith.constant dense<0.000000e+00> : vector<1xf32>
      %161 = vector.multi_reduction <add>, %160, %cst_66 [1, 2] : vector<1x1x128xf32> to vector<1xf32>
      %162 = vector.shape_cast %161 : vector<1xf32> to vector<1x1x1xf32>
      %163 = vector.extract %162[0, 0, 0] : f32 from vector<1x1x1xf32>
      %164 = arith.subf %158, %163 : f32
      %165 = arith.mulf %153, %153 : vector<128x128xf32>
      %166 = vector.shape_cast %165 : vector<128x128xf32> to vector<1x128x128xf32>
      %cst_67 = arith.constant dense<0.000000e+00> : vector<1xf32>
      %167 = vector.multi_reduction <add>, %166, %cst_67 [1, 2] : vector<1x128x128xf32> to vector<1xf32>
      %168 = vector.shape_cast %167 : vector<1xf32> to vector<1x1x1xf32>
      %169 = vector.extract %168[0, 0, 0] : f32 from vector<1x1x1xf32>
      %170 = arith.mulf %147, %147 : vector<1x128xf32>
      %171 = vector.shape_cast %170 : vector<1x128xf32> to vector<1x1x128xf32>
      %cst_68 = arith.constant dense<0.000000e+00> : vector<1xf32>
      %172 = vector.multi_reduction <add>, %171, %cst_68 [1, 2] : vector<1x1x128xf32> to vector<1xf32>
      %173 = vector.shape_cast %172 : vector<1xf32> to vector<1x1x1xf32>
      %174 = vector.extract %173[0, 0, 0] : f32 from vector<1x1x1xf32>
      %175 = arith.subf %169, %174 : f32
      %176 = arith.addf %164, %175 : f32
      %cst_69 = arith.constant 1.600000e+01 : f32
      %177 = arith.divf %176, %cst_69 : f32
      %cst_70 = arith.constant 2.500000e+01 : f32
      %178 = arith.mulf %cst_70, %90 : f32
      %cst_71 = arith.constant 2.500000e+01 : f32
      %179 = arith.mulf %cst_71, %143 : f32
      %180 = arith.addf %178, %179 : f32
      %cst_72 = arith.constant 1.000000e+00 : f32
      %181 = arith.mulf %cst_72, %177 : f32
      %182 = arith.addf %180, %181 : f32
      %c0_73 = arith.constant 0 : index
      %c0_74 = arith.constant 0 : index
      %183 = memref.load %arg9[%c0_73, %c0_74] : memref<1x1xf32, #tpu.memory_space<smem>>
      memref.store %182, %arg9[%c0_73, %c0_74] : memref<1x1xf32, #tpu.memory_space<smem>>
    } else {
    }
    return
  }
  func.func @transform_0(%arg0: i32) -> (i32, i32) {
    %c0_i32 = arith.constant 0 : i32
    %c0_i32_0 = arith.constant 0 : i32
    return %c0_i32, %arg0 : i32, i32
  }
  func.func @transform_1(%arg0: i32) -> (i32, i32) {
    %c0_i32 = arith.constant 0 : i32
    %c0_i32_0 = arith.constant 0 : i32
    return %arg0, %c0_i32 : i32, i32
  }
  func.func @transform_2(%arg0: i32) -> (i32, i32) {
    %c0_i32 = arith.constant 0 : i32
    %c0_i32_0 = arith.constant 0 : i32
    %c0_i32_1 = arith.constant 0 : i32
    return %c0_i32, %c0_i32_0 : i32, i32
  }
  func.func @transform_3(%arg0: i32) -> (i32, i32) {
    %c0_i32 = arith.constant 0 : i32
    %c0_i32_0 = arith.constant 0 : i32
    %c0_i32_1 = arith.constant 0 : i32
    return %c0_i32, %c0_i32_0 : i32, i32
  }
  func.func @transform_4(%arg0: i32) -> (i32, i32) {
    %c0_i32 = arith.constant 0 : i32
    %c0_i32_0 = arith.constant 0 : i32
    %c0_i32_1 = arith.constant 0 : i32
    return %c0_i32, %c0_i32_0 : i32, i32
  }
  func.func @transform_5(%arg0: i32) -> (i32, i32) {
    %c0_i32 = arith.constant 0 : i32
    %c0_i32_0 = arith.constant 0 : i32
    %c0_i32_1 = arith.constant 0 : i32
    return %c0_i32, %c0_i32_0 : i32, i32
  }
  func.func @transform_6(%arg0: i32) -> (i32, i32) {
    %c0_i32 = arith.constant 0 : i32
    %c0_i32_0 = arith.constant 0 : i32
    %c0_i32_1 = arith.constant 0 : i32
    return %c0_i32, %c0_i32_0 : i32, i32
  }
  func.func @transform_7(%arg0: i32) -> (i32, i32) {
    %c0_i32 = arith.constant 0 : i32
    %c0_i32_0 = arith.constant 0 : i32
    %c0_i32_1 = arith.constant 0 : i32
    return %c0_i32, %c0_i32_0 : i32, i32
  }
  func.func @transform_8(%arg0: i32) -> (i32, i32) {
    %c0_i32 = arith.constant 0 : i32
    %c0_i32_0 = arith.constant 0 : i32
    %c0_i32_1 = arith.constant 0 : i32
    return %c0_i32, %c0_i32_0 : i32, i32
  }
}

</mosaic_0001>

<llo_original>
// kernel: tpu_custom_call.1
$region0: #{tpu_custom_call.1}
  #allocation0 [shape = 'u32[]', space=smem, size = 0x4, offset = 0x4, fixed_abs, tag = 'smem constant byte address 0x4 - core index']
  #allocation1 [shape = 'u32[144,128]{1,0:T(1,128)}', space=vmem, size = 0x12000, scoped, tag = 'internal scratch']
  #allocation2 [shape = 'f32[4,128]{1,0:T(4,128)}', space=vmem, size = 0x800, scoped, tag = 'scratch operand']
  %s0 = inlined_call_operand.hbm [shape: bf16[4,1024], index: 0, kind: input, shape index: {}]
  %s1 = inlined_call_operand.hbm [shape: bf16[1024,128], index: 1, kind: input, shape index: {}]
  %s2 = inlined_call_operand.vmem [shape: f32[1,128], index: 2, kind: input, shape index: {}]
  %s3 = inlined_call_operand.hbm [shape: bf16[128,128], index: 3, kind: input, shape index: {}]
  %s4 = inlined_call_operand.vmem [shape: f32[1,128], index: 4, kind: input, shape index: {}]
  %s5 = inlined_call_operand.vmem [shape: f32[1,128], index: 5, kind: input, shape index: {}]
  %s6 = inlined_call_operand.vmem [shape: f32[1,128], index: 6, kind: input, shape index: {}]
  %s7 = inlined_call_operand.hbm [shape: bf16[128,128], index: 7, kind: input, shape index: {}]
  %s8 = inlined_call_operand.hbm [shape: f32[1,1], index: 8, kind: output, shape index: {}]
  %s9 = sld [smem:[#allocation0]]
  $region89: #{tpu_custom_call.1} parent=0
    _
  %s11 = ssub.s32 1, %s9
  %s12 = scalar_select 0, %s11, %s9
  $region1: #{tpu_custom_call.1} parent=0
    #allocation3 [shape = 'u8[4096]{0}', space=vmem, size = 0x1000, scoped, tag = 'input window, operand 0']
    #allocation4 [shape = 's32[2]{0}', space=sflag, size = 0x8, scoped, tag = 'scoped memory for tpu_custom_call.1']
    #allocation5 [shape = 's32[2]{0}', space=sflag, size = 0x8, scoped, tag = 'scoped memory for tpu_custom_call.1']
    #allocation6 [shape = 'u8[131072]{0}', space=vmem, size = 0x20000, scoped, tag = 'input window, operand 1']
    #allocation7 [shape = 's32[2]{0}', space=sflag, size = 0x8, scoped, tag = 'scoped memory for tpu_custom_call.1']
    #allocation8 [shape = 'u8[32768]{0}', space=vmem, size = 0x8000, scoped, tag = 'input window, operand 3, single buffered']
    #allocation9 [shape = 'u8[32768]{0}', space=vmem, size = 0x8000, scoped, tag = 'input window, operand 7, single buffered']
    #allocation10 [shape = 's32[1]{0}', space=sflag, size = 0x4, scoped, tag = 'scoped memory for tpu_custom_call.1']
    #allocation11 [shape = 'u8[512]{0}', space=smem, size = 0x200, scoped, tag = 'output window, operand 0, single buffered']
    %13 = vsyncpa [#allocation4], 0
    %s14 = scalar_lea.sflag [#allocation4], 1
    %15 = vsyncpa %s14, 0
    %16 = vsyncpa [#allocation7], 0
    %s17 = scalar_lea.sflag [#allocation7], 1
    %18 = vsyncpa %s17, 0
    %19 = vsyncpa [#allocation10], 0
    %20 = vsyncpa [#allocation5], 0
    loop: start=0, step=1, limit=6
    $region2: #{tpu_custom_call.1} parent=1 // loop_pre_header
      _
    $region3: #{tpu_custom_call.1} parent=1 // loop_header
      %s22 = sphi 0, %s26
      %p23 = scmp.ge.s32.totalorder %s22, 6
      %s32 = sphi 0, %s34
      %s35 = sphi 0, %s32
      %s36 = sphi 0, %s35
      %s52 = sphi 0, %s36
      %s58 = sphi 0, %s60
      %s61 = sphi 0, %s58
      %s62 = sphi 0, %s61
      %s78 = sphi 0, %s62
      %s82 = sphi 0, %s82
      %s84 = sphi 0, %s82
      %s85 = sphi 0, %s84
      %s99 = sphi 0, %s85
      %s103 = sphi 0, %s103
      %s105 = sphi 0, %s103
      %s106 = sphi 0, %s105
      %s120 = sphi 0, %s106
      %s124 = sphi 0, %s124
      %s126 = sphi 0, %s124
      %s127 = sphi 0, %s126
      %s141 = sphi 0, %s127
      %s145 = sphi 0, %s145
      %s147 = sphi 0, %s145
      %s148 = sphi 0, %s147
      %s162 = sphi 0, %s148
      %s166 = sphi 0, %s166
      %s168 = sphi 0, %s166
      %s169 = sphi 0, %s168
      %s183 = sphi 0, %s169
      %s187 = sphi 0, %s187
      %s189 = sphi 0, %s187
      %s190 = sphi 0, %s189
      %s204 = sphi 0, %s190
      %s208 = sphi 0, %s208
      %s210 = sphi 0, %s208
      %s211 = sphi 0, %s210
      %s225 = sphi 0, %s211
    $region4: #{tpu_custom_call.1} parent=1 // loop_header_branch
      %25 = sbr.rel (%p23) target = $region8
    $region5: #{tpu_custom_call.1} parent=1 // loop_body
      %s27 = ssub.s32 %s22, 1
      %s28 = ssub.s32 %s22, 2
      %s29 = sadd.s32 %s22, 1
      %s30 = ssub.s32 %s22, %s29
      %p31 = scmp.eq.s32.totalorder %s30, 0
      %s33 = sadd.s32 %s32, 1
      %s34 = scalar_select %p31, %s32, %s33
      %p37 = pneg %p31
      %p38 = scmp.eq.s32.totalorder %s22, 3
      %p39 = por %p37, %p38
      %p40 = scmp.ne.s32.totalorder %s32, %s35
      %p41 = scmp.eq.s32.totalorder %s22, 0
      %p42 = por %p40, %p41
      %p43 = scmp.ne.s32.totalorder %s32, %s35
      %p44 = scmp.eq.s32.totalorder %s27, 3
      %p45 = por %p43, %p44
      %p46 = scmp.ne.s32.totalorder %s35, %s36
      %p47 = scmp.eq.s32.totalorder %s27, 0
      %p48 = por %p46, %p47
      %p49 = scmp.ne.s32.totalorder %s35, %s36
      %p50 = scmp.eq.s32.totalorder %s28, 3
      %p51 = por %p49, %p50
      %p53 = scmp.ne.s32.totalorder %s36, %s52
      %p54 = scmp.eq.s32.totalorder %s28, 0
      %p55 = por %p53, %p54
      %s56 = ssub.s32 %s22, %s29
      %p57 = scmp.eq.s32.totalorder %s56, 0
      %s59 = sadd.s32 %s58, 1
      %s60 = scalar_select %p57, %s58, %s59
      %p63 = pneg %p57
      %p64 = scmp.eq.s32.totalorder %s22, 3
      %p65 = por %p63, %p64
      %p66 = scmp.ne.s32.totalorder %s58, %s61
      %p67 = scmp.eq.s32.totalorder %s22, 0
      %p68 = por %p66, %p67
      %p69 = scmp.ne.s32.totalorder %s58, %s61
      %p70 = scmp.eq.s32.totalorder %s27, 3
      %p71 = por %p69, %p70
      %p72 = scmp.ne.s32.totalorder %s61, %s62
      %p73 = scmp.eq.s32.totalorder %s27, 0
      %p74 = por %p72, %p73
      %p75 = scmp.ne.s32.totalorder %s61, %s62
      %p76 = scmp.eq.s32.totalorder %s28, 3
      %p77 = por %p75, %p76
      %p79 = scmp.ne.s32.totalorder %s62, %s78
      %p80 = scmp.eq.s32.totalorder %s28, 0
      %p81 = por %p79, %p80
      %s83 = sadd.s32 %s82, 1
      %p86 = scmp.eq.s32.totalorder %s22, 3
      %p87 = scmp.ne.s32.totalorder %s82, %s84
      %p88 = scmp.eq.s32.totalorder %s22, 0
      %p89 = por %p87, %p88
      %p90 = scmp.ne.s32.totalorder %s82, %s84
      %p91 = scmp.eq.s32.totalorder %s27, 3
      %p92 = por %p90, %p91
      %p93 = scmp.ne.s32.totalorder %s84, %s85
      %p94 = scmp.eq.s32.totalorder %s27, 0
      %p95 = por %p93, %p94
      %p96 = scmp.ne.s32.totalorder %s84, %s85
      %p97 = scmp.eq.s32.totalorder %s28, 3
      %p98 = por %p96, %p97
      %p100 = scmp.ne.s32.totalorder %s85, %s99
      %p101 = scmp.eq.s32.totalorder %s28, 0
      %p102 = por %p100, %p101
      %s104 = sadd.s32 %s103, 1
      %p107 = scmp.eq.s32.totalorder %s22, 3
      %p108 = scmp.ne.s32.totalorder %s103, %s105
      %p109 = scmp.eq.s32.totalorder %s22, 0
      %p110 = por %p108, %p109
      %p111 = scmp.ne.s32.totalorder %s103, %s105
      %p112 = scmp.eq.s32.totalorder %s27, 3
      %p113 = por %p111, %p112
      %p114 = scmp.ne.s32.totalorder %s105, %s106
      %p115 = scmp.eq.s32.totalorder %s27, 0
      %p116 = por %p114, %p115
      %p117 = scmp.ne.s32.totalorder %s105, %s106
      %p118 = scmp.eq.s32.totalorder %s28, 3
      %p119 = por %p117, %p118
      %p121 = scmp.ne.s32.totalorder %s106, %s120
      %p122 = scmp.eq.s32.totalorder %s28, 0
      %p123 = por %p121, %p122
      %s125 = sadd.s32 %s124, 1
      %p128 = scmp.eq.s32.totalorder %s22, 3
      %p129 = scmp.ne.s32.totalorder %s124, %s126
      %p130 = scmp.eq.s32.totalorder %s22, 0
      %p131 = por %p129, %p130
      %p132 = scmp.ne.s32.totalorder %s124, %s126
      %p133 = scmp.eq.s32.totalorder %s27, 3
      %p134 = por %p132, %p133
      %p135 = scmp.ne.s32.totalorder %s126, %s127
      %p136 = scmp.eq.s32.totalorder %s27, 0
      %p137 = por %p135, %p136
      %p138 = scmp.ne.s32.totalorder %s126, %s127
      %p139 = scmp.eq.s32.totalorder %s28, 3
      %p140 = por %p138, %p139
      %p142 = scmp.ne.s32.totalorder %s127, %s141
      %p143 = scmp.eq.s32.totalorder %s28, 0
      %p144 = por %p142, %p143
      %s146 = sadd.s32 %s145, 1
      %p149 = scmp.eq.s32.totalorder %s22, 3
      %p150 = scmp.ne.s32.totalorder %s145, %s147
      %p151 = scmp.eq.s32.totalorder %s22, 0
      %p152 = por %p150, %p151
      %p153 = scmp.ne.s32.totalorder %s145, %s147
      %p154 = scmp.eq.s32.totalorder %s27, 3
      %p155 = por %p153, %p154
      %p156 = scmp.ne.s32.totalorder %s147, %s148
      %p157 = scmp.eq.s32.totalorder %s27, 0
      %p158 = por %p156, %p157
      %p159 = scmp.ne.s32.totalorder %s147, %s148
      %p160 = scmp.eq.s32.totalorder %s28, 3
      %p161 = por %p159, %p160
      %p163 = scmp.ne.s32.totalorder %s148, %s162
      %p164 = scmp.eq.s32.totalorder %s28, 0
      %p165 = por %p163, %p164
      %s167 = sadd.s32 %s166, 1
      %p170 = scmp.eq.s32.totalorder %s22, 3
      %p171 = scmp.ne.s32.totalorder %s166, %s168
      %p172 = scmp.eq.s32.totalorder %s22, 0
      %p173 = por %p171, %p172
      %p174 = scmp.ne.s32.totalorder %s166, %s168
      %p175 = scmp.eq.s32.totalorder %s27, 3
      %p176 = por %p174, %p175
      %p177 = scmp.ne.s32.totalorder %s168, %s169
      %p178 = scmp.eq.s32.totalorder %s27, 0
      %p179 = por %p177, %p178
      %p180 = scmp.ne.s32.totalorder %s168, %s169
      %p181 = scmp.eq.s32.totalorder %s28, 3
      %p182 = por %p180, %p181
      %p184 = scmp.ne.s32.totalorder %s169, %s183
      %p185 = scmp.eq.s32.totalorder %s28, 0
      %p186 = por %p184, %p185
      %s188 = sadd.s32 %s187, 1
      %p191 = scmp.eq.s32.totalorder %s22, 3
      %p192 = scmp.ne.s32.totalorder %s187, %s189
      %p193 = scmp.eq.s32.totalorder %s22, 0
      %p194 = por %p192, %p193
      %p195 = scmp.ne.s32.totalorder %s187, %s189
      %p196 = scmp.eq.s32.totalorder %s27, 3
      %p197 = por %p195, %p196
      %p198 = scmp.ne.s32.totalorder %s189, %s190
      %p199 = scmp.eq.s32.totalorder %s27, 0
      %p200 = por %p198, %p199
      %p201 = scmp.ne.s32.totalorder %s189, %s190
      %p202 = scmp.eq.s32.totalorder %s28, 3
      %p203 = por %p201, %p202
      %p205 = scmp.ne.s32.totalorder %s190, %s204
      %p206 = scmp.eq.s32.totalorder %s28, 0
      %p207 = por %p205, %p206
      %s209 = sadd.s32 %s208, 1
      %p212 = scmp.eq.s32.totalorder %s22, 3
      %p213 = scmp.ne.s32.totalorder %s208, %s210
      %p214 = scmp.eq.s32.totalorder %s22, 0
      %p215 = por %p213, %p214
      %p216 = scmp.ne.s32.totalorder %s208, %s210
      %p217 = scmp.eq.s32.totalorder %s27, 3
      %p218 = por %p216, %p217
      %p219 = scmp.ne.s32.totalorder %s210, %s211
      %p220 = scmp.eq.s32.totalorder %s27, 0
      %p221 = por %p219, %p220
      %p222 = scmp.ne.s32.totalorder %s210, %s211
      %p223 = scmp.eq.s32.totalorder %s28, 3
      %p224 = por %p222, %p223
      %p226 = scmp.ne.s32.totalorder %s211, %s225
      %p227 = scmp.eq.s32.totalorder %s28, 0
      %p228 = por %p226, %p227
      %p229 = scmp.le.s32.totalorder 1, %s22
      %p230 = scmp.lt.s32.totalorder %s22, 5
      %p231 = pnand %p229, %p230
      %p232 = pneg %p231
      // Predicated region
      $region9: #{tpu_custom_call.1} parent=5 // pred_check
        _
      $region10: #{tpu_custom_call.1} parent=5 // pred_check_branch
        %234 = sbr.rel (%p231) target = $region12
      $region11: #{tpu_custom_call.1} parent=5 // pred_region
        %s235 = ssub.s32 %s22, 1
        // Predicated region
        $region13: #{tpu_custom_call.1} parent=11 // pred_check
          %p236 = pneg %p95
        $region14: #{tpu_custom_call.1} parent=11 // pred_check_branch
          %238 = sbr.rel (%p236) target = $region16
        $region15: #{tpu_custom_call.1} parent=11 // pred_region
          _
        $region16: #{tpu_custom_call.1} parent=11 // pred_fallthru
          _
        // Predicated region
        $region17: #{tpu_custom_call.1} parent=11 // pred_check
          %p239 = pneg %p116
        $region18: #{tpu_custom_call.1} parent=11 // pred_check_branch
          %241 = sbr.rel (%p239) target = $region20
        $region19: #{tpu_custom_call.1} parent=11 // pred_region
          %s243 = ssub.s32 1024, 1024
          %244 = vsyncadd [#allocation7], %s243
          %s245 = sshll.u32 [#allocation8], 4
          %s246 = int_to_ptr.vmem [resolvable:$true] %s245
          %251 = dma.hbm_to_vmem [thread:$0]  %s3, 1024, %s246, [#allocation7], 64, 64, 4
        $region20: #{tpu_custom_call.1} parent=11 // pred_fallthru
          _
        // Predicated region
        $region21: #{tpu_custom_call.1} parent=11 // pred_check
          %p252 = pneg %p137
        $region22: #{tpu_custom_call.1} parent=11 // pred_check_branch
          %254 = sbr.rel (%p252) target = $region24
        $region23: #{tpu_custom_call.1} parent=11 // pred_region
          _
        $region24: #{tpu_custom_call.1} parent=11 // pred_fallthru
          _
        // Predicated region
        $region25: #{tpu_custom_call.1} parent=11 // pred_check
          %p255 = pneg %p158
        $region26: #{tpu_custom_call.1} parent=11 // pred_check_branch
          %257 = sbr.rel (%p255) target = $region28
        $region27: #{tpu_custom_call.1} parent=11 // pred_region
          _
        $region28: #{tpu_custom_call.1} parent=11 // pred_fallthru
          _
        // Predicated region
        $region29: #{tpu_custom_call.1} parent=11 // pred_check
          %p258 = pneg %p179
        $region30: #{tpu_custom_call.1} parent=11 // pred_check_branch
          %260 = sbr.rel (%p258) target = $region32
        $region31: #{tpu_custom_call.1} parent=11 // pred_region
          _
        $region32: #{tpu_custom_call.1} parent=11 // pred_fallthru
          _
        // Predicated region
        $region33: #{tpu_custom_call.1} parent=11 // pred_check
          %p261 = pneg %p200
        $region34: #{tpu_custom_call.1} parent=11 // pred_check_branch
          %263 = sbr.rel (%p261) target = $region36
        $region35: #{tpu_custom_call.1} parent=11 // pred_region
          %s265 = ssub.s32 1024, 1024
          %266 = vsyncadd [#allocation10], %s265
          %s267 = sshll.u32 [#allocation9], 4
          %s268 = int_to_ptr.vmem [resolvable:$true] %s267
          %273 = dma.hbm_to_vmem [thread:$0]  %s7, 1024, %s268, [#allocation10], 64, 64, 4
        $region36: #{tpu_custom_call.1} parent=11 // pred_fallthru
          _
      $region12: #{tpu_custom_call.1} parent=5 // pred_fallthru
        _
      %p274 = scmp.lt.s32.totalorder %s22, 4
      // Predicated region
      $region37: #{tpu_custom_call.1} parent=5 // pred_check
        %p275 = pneg %p274
      $region38: #{tpu_custom_call.1} parent=5 // pred_check_branch
        %277 = sbr.rel (%p275) target = $region40
      $region39: #{tpu_custom_call.1} parent=5 // pred_region
        // Predicated region
        $region41: #{tpu_custom_call.1} parent=39 // pred_check
          %p278 = pneg %p42
        $region42: #{tpu_custom_call.1} parent=39 // pred_check_branch
          %280 = sbr.rel (%p278) target = $region44
        $region43: #{tpu_custom_call.1} parent=39 // pred_region
          %s281 = sand.u32 %s32, 1
          %s282 = scalar_lea.sflag [#allocation4], %s281
          %s283 = sand.u32 %s32, 1
          %s284 = smul.addr %s283, 4
          %s285 = scalar_lea.vmem [#allocation3], %s284
          %s286 = smul.u32 2, %s22
          %s288 = ssub.s32 64, 64
          %289 = vsyncadd %s282, %s288
          %s290 = smul.addr %s286, 32
          %s291 = scalar_lea.hbm %s0, %s290
          %s293 = sshll.u32 %s285, 4
          %s294 = int_to_ptr.vmem [resolvable:$true] %s293
          %296 = dma.hbm_to_vmem [thread:$0]  %s291, 64, %s294, %s282
        $region44: #{tpu_custom_call.1} parent=39 // pred_fallthru
          _
        // Predicated region
        $region45: #{tpu_custom_call.1} parent=39 // pred_check
          %p297 = pneg %p68
        $region46: #{tpu_custom_call.1} parent=39 // pred_check_branch
          %299 = sbr.rel (%p297) target = $region48
        $region47: #{tpu_custom_call.1} parent=39 // pred_region
          %s300 = sand.u32 %s22, 1
          %s301 = scalar_lea.sflag [#allocation7], %s300
          %s302 = sand.u32 %s58, 1
          %s303 = smul.addr %s302, 128
          %s304 = scalar_lea.vmem [#allocation6], %s303
          %s305 = smul.u32 32, %s22
          %s307 = ssub.s32 2048, 2048
          %308 = vsyncadd %s301, %s307
          %s309 = smul.addr %s305, 64
          %s310 = scalar_lea.hbm %s1, %s309
          %s311 = sshll.u32 %s304, 4
          %s312 = int_to_ptr.vmem [resolvable:$true] %s311
          %317 = dma.hbm_to_vmem [thread:$0]  %s310, 2048, %s312, %s301, 64, 64, 4
        $region48: #{tpu_custom_call.1} parent=39 // pred_fallthru
          _
      $region40: #{tpu_custom_call.1} parent=5 // pred_fallthru
        _
      %p318 = scmp.le.s32.totalorder 1, %s22
      %p319 = scmp.lt.s32.totalorder %s22, 5
      %p320 = pnand %p318, %p319
      %p321 = pneg %p320
      // Predicated region
      $region49: #{tpu_custom_call.1} parent=5 // pred_check
        _
      $region50: #{tpu_custom_call.1} parent=5 // pred_check_branch
        %323 = sbr.rel (%p320) target = $region52
      $region51: #{tpu_custom_call.1} parent=5 // pred_region
        %s324 = ssub.s32 %s22, 1
        %s325 = sand.u32 %s35, 1
        %s326 = scalar_lea.sflag [#allocation4], %s325
        %s327 = sand.u32 %s35, 1
        %s328 = smul.addr %s327, 4
        %s329 = scalar_lea.vmem [#allocation3], %s328
        // Predicated region
        $region53: #{tpu_custom_call.1} parent=51 // pred_check
          %p330 = pneg %p48
        $region54: #{tpu_custom_call.1} parent=51 // pred_check_branch
          %332 = sbr.rel (%p330) target = $region56
        $region55: #{tpu_custom_call.1} parent=51 // pred_region
          %333 = dma.done %s326, 64
        $region56: #{tpu_custom_call.1} parent=51 // pred_fallthru
          _
        %s334 = sand.u32 %s27, 1
        %s335 = scalar_lea.sflag [#allocation7], %s334
        %s336 = sand.u32 %s61, 1
        %s337 = smul.addr %s336, 128
        %s338 = scalar_lea.vmem [#allocation6], %s337
        // Predicated region
        $region57: #{tpu_custom_call.1} parent=51 // pred_check
          %p339 = pneg %p74
        $region58: #{tpu_custom_call.1} parent=51 // pred_check_branch
          %341 = sbr.rel (%p339) target = $region60
        $region59: #{tpu_custom_call.1} parent=51 // pred_region
          %342 = dma.done %s335, 2048
        $region60: #{tpu_custom_call.1} parent=51 // pred_fallthru
          _
        // Predicated region
        $region61: #{tpu_custom_call.1} parent=51 // pred_check
          %p343 = pneg %p116
        $region62: #{tpu_custom_call.1} parent=51 // pred_check_branch
          %345 = sbr.rel (%p343) target = $region64
        $region63: #{tpu_custom_call.1} parent=51 // pred_region
          %346 = dma.done [#allocation7], 1024
        $region64: #{tpu_custom_call.1} parent=51 // pred_fallthru
          _
        // Predicated region
        $region65: #{tpu_custom_call.1} parent=51 // pred_check
          %p347 = pneg %p200
        $region66: #{tpu_custom_call.1} parent=51 // pred_check_branch
          %349 = sbr.rel (%p347) target = $region68
        $region67: #{tpu_custom_call.1} parent=51 // pred_region
          %350 = dma.done [#allocation10], 1024
        $region68: #{tpu_custom_call.1} parent=51 // pred_fallthru
          _
        %s351 = sand.u32 %s35, 1
        %s352 = scalar_lea.sflag [#allocation4], %s351
        %s353 = sand.u32 %s35, 1
        %s354 = smul.addr %s353, 4
        %s355 = scalar_lea.vmem [#allocation3], %s354
        %p356 = pneg %p48
        %p357 = pneg %p45
        %s358 = sand.u32 %s27, 1
        %s359 = scalar_lea.sflag [#allocation7], %s358
        %s360 = sand.u32 %s61, 1
        %s361 = smul.addr %s360, 128
        %s362 = scalar_lea.vmem [#allocation6], %s361
        %p363 = pneg %p74
        %p364 = pneg %p71
        %p365 = pneg %p95
        %p366 = pneg %p92
        %p367 = pneg %p116
        %p368 = pneg %p113
        %p369 = pneg %p137
        %p370 = pneg %p134
        %p371 = pneg %p158
        %p372 = pneg %p155
        %p373 = pneg %p179
        %p374 = pneg %p176
        %p375 = pneg %p200
        %p376 = pneg %p197
        %p377 = pneg %p221
        %p378 = pneg %p218
        %s379 = smul.u32 2, %s27
        %s380 = smul.u32 32, %s27
        %p382 = scmp.eq.s32.totalorder %s27, 0
        // Predicated region
        $region69: #{tpu_custom_call.1} parent=51 // pred_check
          %p383 = pneg %p382
        $region70: #{tpu_custom_call.1} parent=51 // pred_check_branch
          %385 = sbr.rel (%p383) target = $region72
        $region71: #{tpu_custom_call.1} parent=51 // pred_region
          %386 = vst [vmem:[#allocation2] sm:$0xf] 0.0
        $region72: #{tpu_custom_call.1} parent=51 // pred_fallthru
          _
        %v387 = vld [vmem:[#allocation2] sm:$0xf]
        %v388 = vld [vmem:[%s329] sm:$0xf]
        %v389 = vld [vmem:[%s338] sm:$0xf]
        %v390 = vld [vmem:[%s338 + $0x4] sm:$0xf]
        %v391 = vld [vmem:[%s338 + $0x8] sm:$0xf]
        %v392 = vld [vmem:[%s338 + $0xc] sm:$0xf]
        %v393 = vld [vmem:[%s338 + $0x10] sm:$0xf]
        %v394 = vld [vmem:[%s338 + $0x14] sm:$0xf]
        %v395 = vld [vmem:[%s338 + $0x18] sm:$0xf]
        %v396 = vld [vmem:[%s338 + $0x1c] sm:$0xf]
        %v397 = vld [vmem:[%s338 + $0x20] sm:$0xf]
        %v398 = vld [vmem:[%s338 + $0x24] sm:$0xf]
        %v399 = vld [vmem:[%s338 + $0x28] sm:$0xf]
        %v400 = vld [vmem:[%s338 + $0x2c] sm:$0xf]
        %v401 = vld [vmem:[%s338 + $0x30] sm:$0xf]
        %v402 = vld [vmem:[%s338 + $0x34] sm:$0xf]
        %v403 = vld [vmem:[%s338 + $0x38] sm:$0xf]
        %v404 = vld [vmem:[%s338 + $0x3c] sm:$0xf]
        %v405 = vld [vmem:[%s338 + $0x40] sm:$0xf]
        %v406 = vld [vmem:[%s338 + $0x44] sm:$0xf]
        %v407 = vld [vmem:[%s338 + $0x48] sm:$0xf]
        %v408 = vld [vmem:[%s338 + $0x4c] sm:$0xf]
        %v409 = vld [vmem:[%s338 + $0x50] sm:$0xf]
        %v410 = vld [vmem:[%s338 + $0x54] sm:$0xf]
        %v411 = vld [vmem:[%s338 + $0x58] sm:$0xf]
        %v412 = vld [vmem:[%s338 + $0x5c] sm:$0xf]
        %v413 = vld [vmem:[%s338 + $0x60] sm:$0xf]
        %v414 = vld [vmem:[%s338 + $0x64] sm:$0xf]
        %v415 = vld [vmem:[%s338 + $0x68] sm:$0xf]
        %v416 = vld [vmem:[%s338 + $0x6c] sm:$0xf]
        %v417 = vld [vmem:[%s338 + $0x70] sm:$0xf]
        %v418 = vld [vmem:[%s338 + $0x74] sm:$0xf]
        %v419 = vld [vmem:[%s338 + $0x78] sm:$0xf]
        %v420 = vld [vmem:[%s338 + $0x7c] sm:$0xf]
        %v423 = vunpack.c.l.s4 1983009808
        %v424 = vunpack.c.0.s8 %v423
        %v425 = vlaneseq
        %v426 = vshrl.u32 %v425, 7
        %v427 = vsub.s32 %v424, %v426
        %v428 = vrot.slane %v388, %v427
        %v429 = vcombine.high %v428, %v428
        %v464 = vunpack.c.l.b16 %v389
        %v465 = vunpack.c.l.b16 %v390
        %v466 = vunpack.c.l.b16 %v391
        %v467 = vunpack.c.l.b16 %v392
        %v468 = vunpack.c.l.b16 %v393
        %v469 = vunpack.c.l.b16 %v394
        %v470 = vunpack.c.l.b16 %v395
        %v471 = vunpack.c.l.b16 %v396
        %v472 = vunpack.c.l.b16 %v397
        %v473 = vunpack.c.l.b16 %v398
        %v474 = vunpack.c.l.b16 %v399
        %v475 = vunpack.c.l.b16 %v400
        %v476 = vunpack.c.l.b16 %v401
        %v477 = vunpack.c.l.b16 %v402
        %v478 = vunpack.c.l.b16 %v403
        %v479 = vunpack.c.l.b16 %v404
        %v480 = vunpack.c.l.b16 %v405
        %v481 = vunpack.c.l.b16 %v406
        %v482 = vunpack.c.l.b16 %v407
        %v483 = vunpack.c.l.b16 %v408
        %v484 = vunpack.c.l.b16 %v409
        %v485 = vunpack.c.l.b16 %v410
        %v486 = vunpack.c.l.b16 %v411
        %v487 = vunpack.c.l.b16 %v412
        %v488 = vunpack.c.l.b16 %v413
        %v489 = vunpack.c.l.b16 %v414
        %v490 = vunpack.c.l.b16 %v415
        %v491 = vunpack.c.l.b16 %v416
        %v492 = vunpack.c.l.b16 %v417
        %v493 = vunpack.c.l.b16 %v418
        %v494 = vunpack.c.l.b16 %v419
        %v495 = vunpack.c.l.b16 %v420
        %v496 = vpack.c.b16 %v465, %v464
        %v497 = vpack.c.b16 %v467, %v466
        %v498 = vpack.c.b16 %v469, %v468
        %v499 = vpack.c.b16 %v471, %v470
        %v500 = vpack.c.b16 %v473, %v472
        %v501 = vpack.c.b16 %v475, %v474
        %v502 = vpack.c.b16 %v477, %v476
        %v503 = vpack.c.b16 %v479, %v478
        %v504 = vpack.c.b16 %v481, %v480
        %v505 = vpack.c.b16 %v483, %v482
        %v506 = vpack.c.b16 %v485, %v484
        %v507 = vpack.c.b16 %v487, %v486
        %v508 = vpack.c.b16 %v489, %v488
        %v509 = vpack.c.b16 %v491, %v490
        %v510 = vpack.c.b16 %v493, %v492
        %v511 = vpack.c.b16 %v495, %v494
        %528 = vmatprep.subr.bf16.mxu0 0
        %529 = vmatpush1.bf16.msra.mxu0 %v503
        %530 = vmatprep.subr.bf16.mxu0 0
        %531 = vmatpush1.bf16.msra.mxu0 %v502
        %532 = vmatprep.subr.bf16.mxu0 0
        %533 = vmatpush1.bf16.msra.mxu0 %v501
        %534 = vmatprep.subr.bf16.mxu0 0
        %535 = vmatpush1.bf16.msra.mxu0 %v500
        %536 = vmatprep.subr.bf16.mxu0 0
        %537 = vmatpush1.bf16.msra.mxu0 %v499
        %538 = vmatprep.subr.bf16.mxu0 0
        %539 = vmatpush1.bf16.msra.mxu0 %v498
        %540 = vmatprep.subr.bf16.mxu0 0
        %541 = vmatpush1.bf16.msra.mxu0 %v497
        %542 = vmatprep.subr.bf16.mxu0 0
        %543 = vmatpush1.bf16.msra.mxu0 %v496
        %544 = vmatprep.subr.bf16.mxu0 0
        %545 = vmatpush2.bf16.msra.mxu0 %v511
        %546 = vmatprep.subr.bf16.mxu0 0
        %547 = vmatpush2.bf16.msra.mxu0 %v510
        %548 = vmatprep.subr.bf16.mxu0 0
        %549 = vmatpush2.bf16.msra.mxu0 %v509
        %550 = vmatprep.subr.bf16.mxu0 0
        %551 = vmatpush2.bf16.msra.mxu0 %v508
        %552 = vmatprep.subr.bf16.mxu0 0
        %553 = vmatpush2.bf16.msra.mxu0 %v507
        %554 = vmatprep.subr.bf16.mxu0 0
        %555 = vmatpush2.bf16.msra.mxu0 %v506
        %556 = vmatprep.subr.bf16.mxu0 0
        %557 = vmatpush2.bf16.msra.mxu0 %v505
        %558 = vmatprep.subr.bf16.mxu0 0
        %559 = vmatpush2.bf16.msra.mxu0 %v504
        %560 = vmatprep.mubr.bf16.mxu0 %v429
        %561 = vmatmul.mubr.bf16.gmra.mxu0 %v428
        %v562 = vpop.f32.mrf.mxu0
        %v563 = vadd.f32 0.0, %v562
        %v564 = vpop.f32.mrf.mxu0
        %v565 = vpop.f32.mrf.mxu0
        %v566 = vpop.f32.mrf.mxu0
        %567 = vdwg.mxu0
        %v568 = vadd.f32 %v387, %v563
        %569 = vst [vmem:[#allocation2] sm:$0xf] %v568
        %p570 = scmp.eq.s32.totalorder %s27, 3
        // Predicated region
        $region73: #{tpu_custom_call.1} parent=51 // pred_check
          %p571 = pneg %p570
        $region74: #{tpu_custom_call.1} parent=51 // pred_check_branch
          %573 = sbr.rel (%p571) target = $region76
        $region75: #{tpu_custom_call.1} parent=51 // pred_region
          %v574 = vld [vmem:[#allocation2] sm:$0xf]
          %v575 = vld [vmem:[%s2] sm:$0x1]
          %v577 = vlaneseq
          %v578 = vshrl.u32 %v577, 7
          %v579 = vsub.s32 0, %v578
          %v580 = vrot.slane %v575, %v579
          %v582 = vadd.f32 %v574, %v580
          %v583 = vpack.c.bf16 %v582, %v582
          %v584 = vld [vmem:[#allocation8] sm:$0xf]
          %v585 = vld [vmem:[#allocation8 + $0x4] sm:$0xf]
          %v586 = vld [vmem:[#allocation8 + $0x8] sm:$0xf]
          %v587 = vld [vmem:[#allocation8 + $0xc] sm:$0xf]
          %v588 = vld [vmem:[#allocation8 + $0x10] sm:$0xf]
          %v589 = vld [vmem:[#allocation8 + $0x14] sm:$0xf]
          %v590 = vld [vmem:[#allocation8 + $0x18] sm:$0xf]
          %v591 = vld [vmem:[#allocation8 + $0x1c] sm:$0xf]
          %v592 = vld [vmem:[#allocation8 + $0x20] sm:$0xf]
          %v593 = vld [vmem:[#allocation8 + $0x24] sm:$0xf]
          %v594 = vld [vmem:[#allocation8 + $0x28] sm:$0xf]
          %v595 = vld [vmem:[#allocation8 + $0x2c] sm:$0xf]
          %v596 = vld [vmem:[#allocation8 + $0x30] sm:$0xf]
          %v597 = vld [vmem:[#allocation8 + $0x34] sm:$0xf]
          %v598 = vld [vmem:[#allocation8 + $0x38] sm:$0xf]
          %v599 = vld [vmem:[#allocation8 + $0x3c] sm:$0xf]
          %v600 = vld [vmem:[%s4] sm:$0x1]
          %v602 = vlaneseq
          %v603 = vshrl.u32 %v602, 7
          %v604 = vsub.s32 0, %v603
          %v605 = vrot.slane %v600, %v604
          %v623 = vunpack.c.l.b16 %v584
          %v624 = vunpack.c.l.b16 %v585
          %v625 = vunpack.c.l.b16 %v586
          %v626 = vunpack.c.l.b16 %v587
          %v627 = vunpack.c.l.b16 %v588
          %v628 = vunpack.c.l.b16 %v589
          %v629 = vunpack.c.l.b16 %v590
          %v630 = vunpack.c.l.b16 %v591
          %v631 = vunpack.c.l.b16 %v592
          %v632 = vunpack.c.l.b16 %v593
          %v633 = vunpack.c.l.b16 %v594
          %v634 = vunpack.c.l.b16 %v595
          %v635 = vunpack.c.l.b16 %v596
          %v636 = vunpack.c.l.b16 %v597
          %v637 = vunpack.c.l.b16 %v598
          %v638 = vunpack.c.l.b16 %v599
          %v639 = vpack.c.b16 %v624, %v623
          %v640 = vpack.c.b16 %v626, %v625
          %v641 = vpack.c.b16 %v628, %v627
          %v642 = vpack.c.b16 %v630, %v629
          %v643 = vpack.c.b16 %v632, %v631
          %v644 = vpack.c.b16 %v634, %v633
          %v645 = vpack.c.b16 %v636, %v635
          %v646 = vpack.c.b16 %v638, %v637
          %655 = vmatprep.subr.bf16.mxu0 0
          %656 = vmatpush1.bf16.msra.mxu0 %v646
          %657 = vmatprep.subr.bf16.mxu0 0
          %658 = vmatpush1.bf16.msra.mxu0 %v645
          %659 = vmatprep.subr.bf16.mxu0 0
          %660 = vmatpush1.bf16.msra.mxu0 %v644
          %661 = vmatprep.subr.bf16.mxu0 0
          %662 = vmatpush1.bf16.msra.mxu0 %v643
          %663 = vmatprep.subr.bf16.mxu0 0
          %664 = vmatpush1.bf16.msra.mxu0 %v642
          %665 = vmatprep.subr.bf16.mxu0 0
          %666 = vmatpush1.bf16.msra.mxu0 %v641
          %667 = vmatprep.subr.bf16.mxu0 0
          %668 = vmatpush1.bf16.msra.mxu0 %v640
          %669 = vmatprep.subr.bf16.mxu0 0
          %670 = vmatpush1.bf16.msra.mxu0 %v639
          %671 = vmatprep.subr.bf16.mxu0 0
          %672 = vmatpush2.bf16.msra.mxu0 0
          %673 = vmatprep.subr.bf16.mxu0 0
          %674 = vmatpush2.bf16.msra.mxu0 0
          %675 = vmatprep.subr.bf16.mxu0 0
          %676 = vmatpush2.bf16.msra.mxu0 0
          %677 = vmatprep.subr.bf16.mxu0 0
          %678 = vmatpush2.bf16.msra.mxu0 0
          %679 = vmatprep.subr.bf16.mxu0 0
          %680 = vmatpush2.bf16.msra.mxu0 0
          %681 = vmatprep.subr.bf16.mxu0 0
          %682 = vmatpush2.bf16.msra.mxu0 0
          %683 = vmatprep.subr.bf16.mxu0 0
          %684 = vmatpush2.bf16.msra.mxu0 0
          %685 = vmatprep.subr.bf16.mxu0 0
          %686 = vmatpush2.bf16.msra.mxu0 0
          %687 = vmatprep.mubr.bf16.mxu0 0
          %688 = vmatmul.mubr.bf16.gmra.mxu0 %v583
          %v689 = vpop.f32.mrf.mxu0
          %v690 = vadd.f32 %v605, %v689
          %v691 = vpop.f32.mrf.mxu0
          %v692 = vpop.f32.mrf.mxu0
          %v693 = vpop.f32.mrf.mxu0
          %694 = vdwg.mxu0
          %v695 = vld [vmem:[%s5] sm:$0x1]
          %v696 = vld [vmem:[%s6] sm:$0x1]
          %vm697 = vcmask 1041408
          %v698 = vsel %vm697, %v690, 0.0
          %v699 = vrot.slane %v698, 4
          %v700 = vadd.f32 %v698, %v699
          %v701 = vrot.slane %v700, 2
          %v702 = vadd.f32 %v700, %v701
          %v703 = vrot.slane %v702, 1
          %v704 = vadd.f32 %v702, %v703
          %v705 = vrcp.pop 2.0
          %v706 = vmul.f32 %v704, %v705
          %v707 = vsub.f32 %v690, %v706
          %v708 = vmul.f32 %v707, %v707
          %v709 = vsel %vm697, %v708, 0.0
          %v710 = vrot.slane %v709, 4
          %v711 = vadd.f32 %v709, %v710
          %v712 = vrot.slane %v711, 2
          %v713 = vadd.f32 %v711, %v712
          %v714 = vrot.slane %v713, 1
          %v715 = vadd.f32 %v713, %v714
          %v716 = vmul.f32 %v715, %v705
          %v717 = vadd.f32 %v716, 1e-05
          %v718 = vrsqrt.pop %v717
          %v719 = vmul.f32 %v707, %v718
          %v721 = vlaneseq
          %v722 = vshrl.u32 %v721, 7
          %v723 = vsub.s32 0, %v722
          %v724 = vrot.slane %v695, %v723
          %v726 = vmul.f32 %v719, %v724
          %v728 = vlaneseq
          %v729 = vshrl.u32 %v728, 7
          %v730 = vsub.s32 0, %v729
          %v731 = vrot.slane %v696, %v730
          %v733 = vadd.f32 %v726, %v731
          %v734 = vmax.f32 %v733, 0.0
          %v735 = vpack.c.bf16 %v734, %v734
          %v736 = vld [vmem:[#allocation9] sm:$0xf]
          %v737 = vld [vmem:[#allocation9 + $0x4] sm:$0xf]
          %v738 = vld [vmem:[#allocation9 + $0x8] sm:$0xf]
          %v739 = vld [vmem:[#allocation9 + $0xc] sm:$0xf]
          %v740 = vld [vmem:[#allocation9 + $0x10] sm:$0xf]
          %v741 = vld [vmem:[#allocation9 + $0x14] sm:$0xf]
          %v742 = vld [vmem:[#allocation9 + $0x18] sm:$0xf]
          %v743 = vld [vmem:[#allocation9 + $0x1c] sm:$0xf]
          %v744 = vld [vmem:[#allocation9 + $0x20] sm:$0xf]
          %v745 = vld [vmem:[#allocation9 + $0x24] sm:$0xf]
          %v746 = vld [vmem:[#allocation9 + $0x28] sm:$0xf]
          %v747 = vld [vmem:[#allocation9 + $0x2c] sm:$0xf]
          %v748 = vld [vmem:[#allocation9 + $0x30] sm:$0xf]
          %v749 = vld [vmem:[#allocation9 + $0x34] sm:$0xf]
          %v750 = vld [vmem:[#allocation9 + $0x38] sm:$0xf]
          %v751 = vld [vmem:[#allocation9 + $0x3c] sm:$0xf]
          %v768 = vunpack.c.l.b16 %v736
          %v769 = vunpack.c.l.b16 %v737
          %v770 = vunpack.c.l.b16 %v738
          %v771 = vunpack.c.l.b16 %v739
          %v772 = vunpack.c.l.b16 %v740
          %v773 = vunpack.c.l.b16 %v741
          %v774 = vunpack.c.l.b16 %v742
          %v775 = vunpack.c.l.b16 %v743
          %v776 = vunpack.c.l.b16 %v744
          %v777 = vunpack.c.l.b16 %v745
          %v778 = vunpack.c.l.b16 %v746
          %v779 = vunpack.c.l.b16 %v747
          %v780 = vunpack.c.l.b16 %v748
          %v781 = vunpack.c.l.b16 %v749
          %v782 = vunpack.c.l.b16 %v750
          %v783 = vunpack.c.l.b16 %v751
          %v784 = vpack.c.b16 %v769, %v768
          %v785 = vpack.c.b16 %v771, %v770
          %v786 = vpack.c.b16 %v773, %v772
          %v787 = vpack.c.b16 %v775, %v774
          %v788 = vpack.c.b16 %v777, %v776
          %v789 = vpack.c.b16 %v779, %v778
          %v790 = vpack.c.b16 %v781, %v780
          %v791 = vpack.c.b16 %v783, %v782
          %800 = vmatprep.subr.bf16.mxu0 0
          %801 = vmatpush1.bf16.msra.mxu0 %v791
          %802 = vmatprep.subr.bf16.mxu0 0
          %803 = vmatpush1.bf16.msra.mxu0 %v790
          %804 = vmatprep.subr.bf16.mxu0 0
          %805 = vmatpush1.bf16.msra.mxu0 %v789
          %806 = vmatprep.subr.bf16.mxu0 0
          %807 = vmatpush1.bf16.msra.mxu0 %v788
          %808 = vmatprep.subr.bf16.mxu0 0
          %809 = vmatpush1.bf16.msra.mxu0 %v787
          %810 = vmatprep.subr.bf16.mxu0 0
          %811 = vmatpush1.bf16.msra.mxu0 %v786
          %812 = vmatprep.subr.bf16.mxu0 0
          %813 = vmatpush1.bf16.msra.mxu0 %v785
          %814 = vmatprep.subr.bf16.mxu0 0
          %815 = vmatpush1.bf16.msra.mxu0 %v784
          %816 = vmatprep.subr.bf16.mxu0 0
          %817 = vmatpush2.bf16.msra.mxu0 0
          %818 = vmatprep.subr.bf16.mxu0 0
          %819 = vmatpush2.bf16.msra.mxu0 0
          %820 = vmatprep.subr.bf16.mxu0 0
          %821 = vmatpush2.bf16.msra.mxu0 0
          %822 = vmatprep.subr.bf16.mxu0 0
          %823 = vmatpush2.bf16.msra.mxu0 0
          %824 = vmatprep.subr.bf16.mxu0 0
          %825 = vmatpush2.bf16.msra.mxu0 0
          %826 = vmatprep.subr.bf16.mxu0 0
          %827 = vmatpush2.bf16.msra.mxu0 0
          %828 = vmatprep.subr.bf16.mxu0 0
          %829 = vmatpush2.bf16.msra.mxu0 0
          %830 = vmatprep.subr.bf16.mxu0 0
          %831 = vmatpush2.bf16.msra.mxu0 0
          %832 = vmatprep.mubr.bf16.mxu0 0
          %833 = vmatmul.mubr.bf16.gmra.mxu0 %v735
          %v834 = vpop.f32.mrf.mxu0
          %v835 = vadd.f32 0.0, %v834
          %v836 = vpop.f32.mrf.mxu0
          %v837 = vpop.f32.mrf.mxu0
          %v838 = vpop.f32.mrf.mxu0
          %839 = vdwg.mxu0
          %v841 = vrot.slane %v690, 2
          %v843 = vsel %vm697, %v841, 0.0
          %v844 = vrot.slane %v843, 4
          %v845 = vadd.f32 %v843, %v844
          %v846 = vrot.slane %v845, 2
          %v847 = vadd.f32 %v845, %v846
          %v848 = vrot.slane %v847, 1
          %v849 = vadd.f32 %v847, %v848
          %v850 = vmul.f32 %v849, %v705
          %v851 = vsub.f32 %v690, %v850
          %v852 = vmul.f32 %v851, %v851
          %v854 = vrot.slane %v852, 2
          %v856 = vsel %vm697, %v854, 0.0
          %v857 = vrot.slane %v856, 4
          %v858 = vadd.f32 %v856, %v857
          %v859 = vrot.slane %v858, 2
          %v860 = vadd.f32 %v858, %v859
          %v861 = vrot.slane %v860, 1
          %v862 = vadd.f32 %v860, %v861
          %v863 = vmul.f32 %v862, %v705
          %v864 = vadd.f32 %v863, 1e-05
          %v865 = vrsqrt.pop %v864
          %v866 = vmul.f32 %v851, %v865
          %v867 = vmul.f32 %v866, %v724
          %v868 = vadd.f32 %v867, %v731
          %v869 = vmax.f32 %v868, 0.0
          %v870 = vpack.c.bf16 %v869, %v869
          %v872 = vrot.slane %v870, 1
          %874 = vmatprep.subr.bf16.mxu0 0
          %875 = vmatpush1.bf16.msra.mxu0 %v791
          %876 = vmatprep.subr.bf16.mxu0 0
          %877 = vmatpush1.bf16.msra.mxu0 %v790
          %878 = vmatprep.subr.bf16.mxu0 0
          %879 = vmatpush1.bf16.msra.mxu0 %v789
          %880 = vmatprep.subr.bf16.mxu0 0
          %881 = vmatpush1.bf16.msra.mxu0 %v788
          %882 = vmatprep.subr.bf16.mxu0 0
          %883 = vmatpush1.bf16.msra.mxu0 %v787
          %884 = vmatprep.subr.bf16.mxu0 0
          %885 = vmatpush1.bf16.msra.mxu0 %v786
          %886 = vmatprep.subr.bf16.mxu0 0
          %887 = vmatpush1.bf16.msra.mxu0 %v785
          %888 = vmatprep.subr.bf16.mxu0 0
          %889 = vmatpush1.bf16.msra.mxu0 %v784
          %890 = vmatprep.subr.bf16.mxu0 0
          %891 = vmatpush2.bf16.msra.mxu0 0
          %892 = vmatprep.subr.bf16.mxu0 0
          %893 = vmatpush2.bf16.msra.mxu0 0
          %894 = vmatprep.subr.bf16.mxu0 0
          %895 = vmatpush2.bf16.msra.mxu0 0
          %896 = vmatprep.subr.bf16.mxu0 0
          %897 = vmatpush2.bf16.msra.mxu0 0
          %898 = vmatprep.subr.bf16.mxu0 0
          %899 = vmatpush2.bf16.msra.mxu0 0
          %900 = vmatprep.subr.bf16.mxu0 0
          %901 = vmatpush2.bf16.msra.mxu0 0
          %902 = vmatprep.subr.bf16.mxu0 0
          %903 = vmatpush2.bf16.msra.mxu0 0
          %904 = vmatprep.subr.bf16.mxu0 0
          %905 = vmatpush2.bf16.msra.mxu0 0
          %906 = vmatprep.mubr.bf16.mxu0 0
          %907 = vmatmul.mubr.bf16.gmra.mxu0 %v872
          %v908 = vpop.f32.mrf.mxu0
          %v909 = vadd.f32 0.0, %v908
          %v910 = vpop.f32.mrf.mxu0
          %v911 = vpop.f32.mrf.mxu0
          %v912 = vpop.f32.mrf.mxu0
          %913 = vdwg.mxu0
          %v914 = vsub.f32 %v835, %v909
          %v915 = vmul.f32 %v914, %v914
          %v916 = vsel %vm697, %v915, 0.0
          %917 = vadd.xlane.f32.xlu0 %v916
          %v918 = vpop.xlane.xlu0 %917
          %v919 = vrot.slane %v918, 4
          %v920 = vadd.f32 %v918, %v919
          %v921 = vrot.slane %v920, 2
          %v922 = vadd.f32 %v920, %v921
          %v923 = vrot.slane %v922, 1
          %v924 = vadd.f32 %v922, %v923
          %s925 = vtos %v924
          %v926 = vrcp.pop 32.0
          %s927 = vtos %v926
          %s928 = smul.f32 %s925, %s927
          %v929 = vsel %vm697, %v835, 0.0
          %v930 = vrot.slane %v929, 4
          %v931 = vadd.f32 %v929, %v930
          %v932 = vrot.slane %v931, 2
          %v933 = vadd.f32 %v931, %v932
          %v934 = vrot.slane %v933, 1
          %v935 = vadd.f32 %v933, %v934
          %v936 = vmul.f32 %v935, %v705
          %v937 = vsub.f32 %v835, %v936
          %v938 = vsel %vm697, %v909, 0.0
          %v939 = vrot.slane %v938, 4
          %v940 = vadd.f32 %v938, %v939
          %v941 = vrot.slane %v940, 2
          %v942 = vadd.f32 %v940, %v941
          %v943 = vrot.slane %v942, 1
          %v944 = vadd.f32 %v942, %v943
          %v945 = vmul.f32 %v944, %v705
          %v946 = vsub.f32 %v909, %v945
          %v947 = vmul.f32 %v937, %v937
          %v948 = vsel %vm697, %v947, 0.0
          %v949 = vrot.slane %v948, 4
          %v950 = vadd.f32 %v948, %v949
          %v951 = vrot.slane %v950, 2
          %v952 = vadd.f32 %v950, %v951
          %v953 = vrot.slane %v952, 1
          %v954 = vadd.f32 %v952, %v953
          %v955 = vmul.f32 %v946, %v946
          %v956 = vsel %vm697, %v955, 0.0
          %v957 = vrot.slane %v956, 4
          %v958 = vadd.f32 %v956, %v957
          %v959 = vrot.slane %v958, 2
          %v960 = vadd.f32 %v958, %v959
          %v961 = vrot.slane %v960, 1
          %v962 = vadd.f32 %v960, %v961
          %v963 = vadd.f32 %v954, 0.0001
          %v964 = vrsqrt.pop %v963
          %v965 = vmul.f32 %v963, %v964
          %vm966 = vcmp.eq.f32.partialorder %v963, inf
          %v967 = vsel %vm966, %v963, %v965
          %vm968 = vcmp.eq.f32.partialorder %v963, 0.0
          %v969 = vand.u32 %v963, 2147483648
          %v970 = vsel %vm968, %v969, %v967
          %v971 = vadd.f32 %v962, 0.0001
          %v972 = vrsqrt.pop %v971
          %v973 = vmul.f32 %v971, %v972
          %vm974 = vcmp.eq.f32.partialorder %v971, inf
          %v975 = vsel %vm974, %v971, %v973
          %vm976 = vcmp.eq.f32.partialorder %v971, 0.0
          %v977 = vand.u32 %v971, 2147483648
          %v978 = vsel %vm976, %v977, %v975
          %v979 = vlaneseq
          %v980 = vand.u32 %v979, 127
          %vm981 = vcmp.lt.s32.totalorder %v980, 16
          %v982 = vsel %vm981, 1, 0
          %v983 = vcvt.s32.f32 %v982
          %v984 = vsub.f32 1.0, %v970
          %v985 = vmax.f32 %v984, 0.0
          %v986 = vmul.f32 %v985, %v983
          %vm987 = vcmask 1040384
          %v988 = vsel %vm987, %v986, 0.0
          %989 = vadd.xlane.f32.xlu0 %v988
          %v990 = vpop.xlane.xlu0 %989
          %v991 = vrot.slane %v990, 4
          %v992 = vadd.f32 %v990, %v991
          %v993 = vrot.slane %v992, 2
          %v994 = vadd.f32 %v992, %v993
          %v995 = vrot.slane %v994, 1
          %v996 = vadd.f32 %v994, %v995
          %s997 = vtos %v996
          %v998 = vsub.f32 1.0, %v978
          %v999 = vmax.f32 %v998, 0.0
          %v1000 = vmul.f32 %v999, %v983
          %v1001 = vsel %vm987, %v1000, 0.0
          %1002 = vadd.xlane.f32.xlu0 %v1001
          %v1003 = vpop.xlane.xlu0 %1002
          %v1004 = vrot.slane %v1003, 4
          %v1005 = vadd.f32 %v1003, %v1004
          %v1006 = vrot.slane %v1005, 2
          %v1007 = vadd.f32 %v1005, %v1006
          %v1008 = vrot.slane %v1007, 1
          %v1009 = vadd.f32 %v1007, %v1008
          %s1010 = vtos %v1009
          %s1011 = sadd.f32 %s997, %s1010
          %v1012 = vrcp.pop 32.0
          %s1013 = vtos %v1012
          %s1014 = smul.f32 %s1011, %s1013
          %1015 = vxpose.xlu0.b32.start [1/16] %v937, 128
          %1016 = vxpose.xlu0.b32.cont [2/16] 0.0, 128
          %1017 = vxpose.xlu0.b32.cont [3/16] 0.0, 128
          %1018 = vxpose.xlu0.b32.cont [4/16] 0.0, 128
          %1019 = vxpose.xlu0.b32.cont [5/16] 0.0, 128
          %1020 = vxpose.xlu0.b32.cont [6/16] 0.0, 128
          %1021 = vxpose.xlu0.b32.cont [7/16] 0.0, 128
          %1022 = vxpose.xlu0.b32.cont [8/16] 0.0, 128
          %1023 = vxpose.xlu0.b32.cont [9/16] 0.0, 128
          %1024 = vxpose.xlu0.b32.cont [10/16] 0.0, 128
          %1025 = vxpose.xlu0.b32.cont [11/16] 0.0, 128
          %1026 = vxpose.xlu0.b32.cont [12/16] 0.0, 128
          %1027 = vxpose.xlu0.b32.cont [13/16] 0.0, 128
          %1028 = vxpose.xlu0.b32.cont [14/16] 0.0, 128
          %1029 = vxpose.xlu0.b32.cont [15/16] 0.0, 128
          %1030 = vxpose.xlu0.b32.end [16/16] 0.0, 128
          %v1031 = vpop.trf.xlu0
          %v1032 = vpop.trf.xlu0
          %v1033 = vpop.trf.xlu0
          %v1034 = vpop.trf.xlu0
          %v1035 = vpop.trf.xlu0
          %v1036 = vpop.trf.xlu0
          %v1037 = vpop.trf.xlu0
          %v1038 = vpop.trf.xlu0
          %v1039 = vpop.trf.xlu0
          %v1040 = vpop.trf.xlu0
          %v1041 = vpop.trf.xlu0
          %v1042 = vpop.trf.xlu0
          %v1043 = vpop.trf.xlu0
          %v1044 = vpop.trf.xlu0
          %v1045 = vpop.trf.xlu0
          %v1046 = vpop.trf.xlu0
          %vm1047 = vcmask 15360
          %v1049 = vsel %vm1047, %v1031, 0
          %v1052 = vsel %vm1047, %v1032, 0
          %v1055 = vsel %vm1047, %v1033, 0
          %v1058 = vsel %vm1047, %v1034, 0
          %v1061 = vsel %vm1047, %v1035, 0
          %v1064 = vsel %vm1047, %v1036, 0
          %v1067 = vsel %vm1047, %v1037, 0
          %v1070 = vsel %vm1047, %v1038, 0
          %v1073 = vsel %vm1047, %v1039, 0
          %v1076 = vsel %vm1047, %v1040, 0
          %v1079 = vsel %vm1047, %v1041, 0
          %v1082 = vsel %vm1047, %v1042, 0
          %v1085 = vsel %vm1047, %v1043, 0
          %v1088 = vsel %vm1047, %v1044, 0
          %v1091 = vsel %vm1047, %v1045, 0
          %v1094 = vsel %vm1047, %v1046, 0
          %v1097 = vsel %vm697, %v937, 0
          %1099 = vmatprep.subr.mxu0 0.0
          %1100 = vmatpush1.msra.mxu0 0.0
          %1101 = vmatprep.subr.mxu0 0.0
          %1102 = vmatpush1.msra.mxu0 0.0
          %1103 = vmatprep.subr.mxu0 0.0
          %1104 = vmatpush1.msra.mxu0 0.0
          %1105 = vmatprep.subr.mxu0 0.0
          %1106 = vmatpush1.msra.mxu0 0.0
          %1107 = vmatprep.subr.mxu0 0.0
          %1108 = vmatpush1.msra.mxu0 0.0
          %1109 = vmatprep.subr.mxu0 0.0
          %1110 = vmatpush1.msra.mxu0 0.0
          %1111 = vmatprep.subr.mxu0 0.0
          %1112 = vmatpush1.msra.mxu0 0.0
          %1113 = vmatprep.subr.mxu0 0.0
          %1114 = vmatpush1.msra.mxu0 0.0
          %1115 = vmatprep.subr.mxu0 0.0
          %1116 = vmatpush1.msra.mxu0 0.0
          %1117 = vmatprep.subr.mxu0 0.0
          %1118 = vmatpush1.msra.mxu0 0.0
          %1119 = vmatprep.subr.mxu0 0.0
          %1120 = vmatpush1.msra.mxu0 0.0
          %1121 = vmatprep.subr.mxu0 0.0
          %1122 = vmatpush1.msra.mxu0 0.0
          %1123 = vmatprep.subr.mxu0 0.0
          %1124 = vmatpush1.msra.mxu0 0.0
          %1125 = vmatprep.subr.mxu0 0.0
          %1126 = vmatpush1.msra.mxu0 0.0
          %1127 = vmatprep.subr.mxu0 0.0
          %1128 = vmatpush1.msra.mxu0 0.0
          %1129 = vmatprep.subr.mxu0 0.0
          %1130 = vmatpush1.msra.mxu0 %v1097
          %1131 = vmatprep.subr.mxu0 0.0
          %1132 = vmatpush2.msra.mxu0 0.0
          %1133 = vmatprep.subr.mxu0 0.0
          %1134 = vmatpush2.msra.mxu0 0.0
          %1135 = vmatprep.subr.mxu0 0.0
          %1136 = vmatpush2.msra.mxu0 0.0
          %1137 = vmatprep.subr.mxu0 0.0
          %1138 = vmatpush2.msra.mxu0 0.0
          %1139 = vmatprep.subr.mxu0 0.0
          %1140 = vmatpush2.msra.mxu0 0.0
          %1141 = vmatprep.subr.mxu0 0.0
          %1142 = vmatpush2.msra.mxu0 0.0
          %1143 = vmatprep.subr.mxu0 0.0
          %1144 = vmatpush2.msra.mxu0 0.0
          %1145 = vmatprep.subr.mxu0 0.0
          %1146 = vmatpush2.msra.mxu0 0.0
          %1147 = vmatprep.subr.mxu0 0.0
          %1148 = vmatpush2.msra.mxu0 0.0
          %1149 = vmatprep.subr.mxu0 0.0
          %1150 = vmatpush2.msra.mxu0 0.0
          %1151 = vmatprep.subr.mxu0 0.0
          %1152 = vmatpush2.msra.mxu0 0.0
          %1153 = vmatprep.subr.mxu0 0.0
          %1154 = vmatpush2.msra.mxu0 0.0
          %1155 = vmatprep.subr.mxu0 0.0
          %1156 = vmatpush2.msra.mxu0 0.0
          %1157 = vmatprep.subr.mxu0 0.0
          %1158 = vmatpush2.msra.mxu0 0.0
          %1159 = vmatprep.subr.mxu0 0.0
          %1160 = vmatpush2.msra.mxu0 0.0
          %1161 = vmatprep.subr.mxu0 0.0
          %1162 = vmatpush2.msra.mxu0 0.0
          %1163 = vmatprep.mubr.f32.mxu0 0.0
          %1164 = vmatmul.mubr.f32.gmra.mxu0 %v1049
          %v1165 = vpop.f32.mrf.mxu0
          %v1166 = vadd.f32 0.0, %v1165
          %v1167 = vpop.f32.mrf.mxu0
          %1168 = vmatprep.mubr.f32.mxu0 0.0
          %1169 = vmatmul.mubr.f32.gmra.mxu0 %v1052
          %v1170 = vpop.f32.mrf.mxu0
          %v1171 = vadd.f32 0.0, %v1170
          %v1172 = vpop.f32.mrf.mxu0
          %1173 = vmatprep.mubr.f32.mxu0 0.0
          %1174 = vmatmul.mubr.f32.gmra.mxu0 %v1055
          %v1175 = vpop.f32.mrf.mxu0
          %v1176 = vadd.f32 0.0, %v1175
          %v1177 = vpop.f32.mrf.mxu0
          %1178 = vmatprep.mubr.f32.mxu0 0.0
          %1179 = vmatmul.mubr.f32.gmra.mxu0 %v1058
          %v1180 = vpop.f32.mrf.mxu0
          %v1181 = vadd.f32 0.0, %v1180
          %v1182 = vpop.f32.mrf.mxu0
          %1183 = vmatprep.mubr.f32.mxu0 0.0
          %1184 = vmatmul.mubr.f32.gmra.mxu0 %v1061
          %v1185 = vpop.f32.mrf.mxu0
          %v1186 = vadd.f32 0.0, %v1185
          %v1187 = vpop.f32.mrf.mxu0
          %1188 = vmatprep.mubr.f32.mxu0 0.0
          %1189 = vmatmul.mubr.f32.gmra.mxu0 %v1064
          %v1190 = vpop.f32.mrf.mxu0
          %v1191 = vadd.f32 0.0, %v1190
          %v1192 = vpop.f32.mrf.mxu0
          %1193 = vmatprep.mubr.f32.mxu0 0.0
          %1194 = vmatmul.mubr.f32.gmra.mxu0 %v1067
          %v1195 = vpop.f32.mrf.mxu0
          %v1196 = vadd.f32 0.0, %v1195
          %v1197 = vpop.f32.mrf.mxu0
          %1198 = vmatprep.mubr.f32.mxu0 0.0
          %1199 = vmatmul.mubr.f32.gmra.mxu0 %v1070
          %v1200 = vpop.f32.mrf.mxu0
          %v1201 = vadd.f32 0.0, %v1200
          %v1202 = vpop.f32.mrf.mxu0
          %1203 = vmatprep.mubr.f32.mxu0 0.0
          %1204 = vmatmul.mubr.f32.gmra.mxu0 %v1073
          %v1205 = vpop.f32.mrf.mxu0
          %v1206 = vadd.f32 0.0, %v1205
          %v1207 = vpop.f32.mrf.mxu0
          %1208 = vmatprep.mubr.f32.mxu0 0.0
          %1209 = vmatmul.mubr.f32.gmra.mxu0 %v1076
          %v1210 = vpop.f32.mrf.mxu0
          %v1211 = vadd.f32 0.0, %v1210
          %v1212 = vpop.f32.mrf.mxu0
          %1213 = vmatprep.mubr.f32.mxu0 0.0
          %1214 = vmatmul.mubr.f32.gmra.mxu0 %v1079
          %v1215 = vpop.f32.mrf.mxu0
          %v1216 = vadd.f32 0.0, %v1215
          %v1217 = vpop.f32.mrf.mxu0
          %1218 = vmatprep.mubr.f32.mxu0 0.0
          %1219 = vmatmul.mubr.f32.gmra.mxu0 %v1082
          %v1220 = vpop.f32.mrf.mxu0
          %v1221 = vadd.f32 0.0, %v1220
          %v1222 = vpop.f32.mrf.mxu0
          %1223 = vmatprep.mubr.f32.mxu0 0.0
          %1224 = vmatmul.mubr.f32.gmra.mxu0 %v1085
          %v1225 = vpop.f32.mrf.mxu0
          %v1226 = vadd.f32 0.0, %v1225
          %v1227 = vpop.f32.mrf.mxu0
          %1228 = vmatprep.mubr.f32.mxu0 0.0
          %1229 = vmatmul.mubr.f32.gmra.mxu0 %v1088
          %v1230 = vpop.f32.mrf.mxu0
          %v1231 = vadd.f32 0.0, %v1230
          %v1232 = vpop.f32.mrf.mxu0
          %1233 = vmatprep.mubr.f32.mxu0 0.0
          %1234 = vmatmul.mubr.f32.gmra.mxu0 %v1091
          %v1235 = vpop.f32.mrf.mxu0
          %v1236 = vadd.f32 0.0, %v1235
          %v1237 = vpop.f32.mrf.mxu0
          %1238 = vmatprep.mubr.f32.mxu0 0.0
          %1239 = vmatmul.mubr.f32.gmra.mxu0 %v1094
          %v1240 = vpop.f32.mrf.mxu0
          %v1241 = vadd.f32 0.0, %v1240
          %v1242 = vpop.f32.mrf.mxu0
          %1243 = vdwg.mxu0
          %1244 = vxpose.xlu0.b32.start [1/16] %v946, 128
          %1245 = vxpose.xlu0.b32.cont [2/16] 0.0, 128
          %1246 = vxpose.xlu0.b32.cont [3/16] 0.0, 128
          %1247 = vxpose.xlu0.b32.cont [4/16] 0.0, 128
          %1248 = vxpose.xlu0.b32.cont [5/16] 0.0, 128
          %1249 = vxpose.xlu0.b32.cont [6/16] 0.0, 128
          %1250 = vxpose.xlu0.b32.cont [7/16] 0.0, 128
          %1251 = vxpose.xlu0.b32.cont [8/16] 0.0, 128
          %1252 = vxpose.xlu0.b32.cont [9/16] 0.0, 128
          %1253 = vxpose.xlu0.b32.cont [10/16] 0.0, 128
          %1254 = vxpose.xlu0.b32.cont [11/16] 0.0, 128
          %1255 = vxpose.xlu0.b32.cont [12/16] 0.0, 128
          %1256 = vxpose.xlu0.b32.cont [13/16] 0.0, 128
          %1257 = vxpose.xlu0.b32.cont [14/16] 0.0, 128
          %1258 = vxpose.xlu0.b32.cont [15/16] 0.0, 128
          %1259 = vxpose.xlu0.b32.end [16/16] 0.0, 128
          %v1260 = vpop.trf.xlu0
          %v1261 = vpop.trf.xlu0
          %v1262 = vpop.trf.xlu0
          %v1263 = vpop.trf.xlu0
          %v1264 = vpop.trf.xlu0
          %v1265 = vpop.trf.xlu0
          %v1266 = vpop.trf.xlu0
          %v1267 = vpop.trf.xlu0
          %v1268 = vpop.trf.xlu0
          %v1269 = vpop.trf.xlu0
          %v1270 = vpop.trf.xlu0
          %v1271 = vpop.trf.xlu0
          %v1272 = vpop.trf.xlu0
          %v1273 = vpop.trf.xlu0
          %v1274 = vpop.trf.xlu0
          %v1275 = vpop.trf.xlu0
          %v1277 = vsel %vm1047, %v1260, 0
          %v1280 = vsel %vm1047, %v1261, 0
          %v1283 = vsel %vm1047, %v1262, 0
          %v1286 = vsel %vm1047, %v1263, 0
          %v1289 = vsel %vm1047, %v1264, 0
          %v1292 = vsel %vm1047, %v1265, 0
          %v1295 = vsel %vm1047, %v1266, 0
          %v1298 = vsel %vm1047, %v1267, 0
          %v1301 = vsel %vm1047, %v1268, 0
          %v1304 = vsel %vm1047, %v1269, 0
          %v1307 = vsel %vm1047, %v1270, 0
          %v1310 = vsel %vm1047, %v1271, 0
          %v1313 = vsel %vm1047, %v1272, 0
          %v1316 = vsel %vm1047, %v1273, 0
          %v1319 = vsel %vm1047, %v1274, 0
          %v1322 = vsel %vm1047, %v1275, 0
          %v1325 = vsel %vm697, %v946, 0
          %1327 = vmatprep.subr.mxu0 0.0
          %1328 = vmatpush1.msra.mxu0 0.0
          %1329 = vmatprep.subr.mxu0 0.0
          %1330 = vmatpush1.msra.mxu0 0.0
          %1331 = vmatprep.subr.mxu0 0.0
          %1332 = vmatpush1.msra.mxu0 0.0
          %1333 = vmatprep.subr.mxu0 0.0
          %1334 = vmatpush1.msra.mxu0 0.0
          %1335 = vmatprep.subr.mxu0 0.0
          %1336 = vmatpush1.msra.mxu0 0.0
          %1337 = vmatprep.subr.mxu0 0.0
          %1338 = vmatpush1.msra.mxu0 0.0
          %1339 = vmatprep.subr.mxu0 0.0
          %1340 = vmatpush1.msra.mxu0 0.0
          %1341 = vmatprep.subr.mxu0 0.0
          %1342 = vmatpush1.msra.mxu0 0.0
          %1343 = vmatprep.subr.mxu0 0.0
          %1344 = vmatpush1.msra.mxu0 0.0
          %1345 = vmatprep.subr.mxu0 0.0
          %1346 = vmatpush1.msra.mxu0 0.0
          %1347 = vmatprep.subr.mxu0 0.0
          %1348 = vmatpush1.msra.mxu0 0.0
          %1349 = vmatprep.subr.mxu0 0.0
          %1350 = vmatpush1.msra.mxu0 0.0
          %1351 = vmatprep.subr.mxu0 0.0
          %1352 = vmatpush1.msra.mxu0 0.0
          %1353 = vmatprep.subr.mxu0 0.0
          %1354 = vmatpush1.msra.mxu0 0.0
          %1355 = vmatprep.subr.mxu0 0.0
          %1356 = vmatpush1.msra.mxu0 0.0
          %1357 = vmatprep.subr.mxu0 0.0
          %1358 = vmatpush1.msra.mxu0 %v1325
          %1359 = vmatprep.subr.mxu0 0.0
          %1360 = vmatpush2.msra.mxu0 0.0
          %1361 = vmatprep.subr.mxu0 0.0
          %1362 = vmatpush2.msra.mxu0 0.0
          %1363 = vmatprep.subr.mxu0 0.0
          %1364 = vmatpush2.msra.mxu0 0.0
          %1365 = vmatprep.subr.mxu0 0.0
          %1366 = vmatpush2.msra.mxu0 0.0
          %1367 = vmatprep.subr.mxu0 0.0
          %1368 = vmatpush2.msra.mxu0 0.0
          %1369 = vmatprep.subr.mxu0 0.0
          %1370 = vmatpush2.msra.mxu0 0.0
          %1371 = vmatprep.subr.mxu0 0.0
          %1372 = vmatpush2.msra.mxu0 0.0
          %1373 = vmatprep.subr.mxu0 0.0
          %1374 = vmatpush2.msra.mxu0 0.0
          %1375 = vmatprep.subr.mxu0 0.0
          %1376 = vmatpush2.msra.mxu0 0.0
          %1377 = vmatprep.subr.mxu0 0.0
          %1378 = vmatpush2.msra.mxu0 0.0
          %1379 = vmatprep.subr.mxu0 0.0
          %1380 = vmatpush2.msra.mxu0 0.0
          %1381 = vmatprep.subr.mxu0 0.0
          %1382 = vmatpush2.msra.mxu0 0.0
          %1383 = vmatprep.subr.mxu0 0.0
          %1384 = vmatpush2.msra.mxu0 0.0
          %1385 = vmatprep.subr.mxu0 0.0
          %1386 = vmatpush2.msra.mxu0 0.0
          %1387 = vmatprep.subr.mxu0 0.0
          %1388 = vmatpush2.msra.mxu0 0.0
          %1389 = vmatprep.subr.mxu0 0.0
          %1390 = vmatpush2.msra.mxu0 0.0
          %1391 = vmatprep.mubr.f32.mxu0 0.0
          %1392 = vmatmul.mubr.f32.gmra.mxu0 %v1277
          %v1393 = vpop.f32.mrf.mxu0
          %v1394 = vadd.f32 0.0, %v1393
          %v1395 = vpop.f32.mrf.mxu0
          %1396 = vmatprep.mubr.f32.mxu0 0.0
          %1397 = vmatmul.mubr.f32.gmra.mxu0 %v1280
          %v1398 = vpop.f32.mrf.mxu0
          %v1399 = vadd.f32 0.0, %v1398
          %v1400 = vpop.f32.mrf.mxu0
          %1401 = vmatprep.mubr.f32.mxu0 0.0
          %1402 = vmatmul.mubr.f32.gmra.mxu0 %v1283
          %v1403 = vpop.f32.mrf.mxu0
          %v1404 = vadd.f32 0.0, %v1403
          %v1405 = vpop.f32.mrf.mxu0
          %1406 = vmatprep.mubr.f32.mxu0 0.0
          %1407 = vmatmul.mubr.f32.gmra.mxu0 %v1286
          %v1408 = vpop.f32.mrf.mxu0
          %v1409 = vadd.f32 0.0, %v1408
          %v1410 = vpop.f32.mrf.mxu0
          %1411 = vmatprep.mubr.f32.mxu0 0.0
          %1412 = vmatmul.mubr.f32.gmra.mxu0 %v1289
          %v1413 = vpop.f32.mrf.mxu0
          %v1414 = vadd.f32 0.0, %v1413
          %v1415 = vpop.f32.mrf.mxu0
          %1416 = vmatprep.mubr.f32.mxu0 0.0
          %1417 = vmatmul.mubr.f32.gmra.mxu0 %v1292
          %v1418 = vpop.f32.mrf.mxu0
          %v1419 = vadd.f32 0.0, %v1418
          %v1420 = vpop.f32.mrf.mxu0
          %1421 = vmatprep.mubr.f32.mxu0 0.0
          %1422 = vmatmul.mubr.f32.gmra.mxu0 %v1295
          %v1423 = vpop.f32.mrf.mxu0
          %v1424 = vadd.f32 0.0, %v1423
          %v1425 = vpop.f32.mrf.mxu0
          %1426 = vmatprep.mubr.f32.mxu0 0.0
          %1427 = vmatmul.mubr.f32.gmra.mxu0 %v1298
          %v1428 = vpop.f32.mrf.mxu0
          %v1429 = vadd.f32 0.0, %v1428
          %v1430 = vpop.f32.mrf.mxu0
          %1431 = vmatprep.mubr.f32.mxu0 0.0
          %1432 = vmatmul.mubr.f32.gmra.mxu0 %v1301
          %v1433 = vpop.f32.mrf.mxu0
          %v1434 = vadd.f32 0.0, %v1433
          %v1435 = vpop.f32.mrf.mxu0
          %1436 = vmatprep.mubr.f32.mxu0 0.0
          %1437 = vmatmul.mubr.f32.gmra.mxu0 %v1304
          %v1438 = vpop.f32.mrf.mxu0
          %v1439 = vadd.f32 0.0, %v1438
          %v1440 = vpop.f32.mrf.mxu0
          %1441 = vmatprep.mubr.f32.mxu0 0.0
          %1442 = vmatmul.mubr.f32.gmra.mxu0 %v1307
          %v1443 = vpop.f32.mrf.mxu0
          %v1444 = vadd.f32 0.0, %v1443
          %v1445 = vpop.f32.mrf.mxu0
          %1446 = vmatprep.mubr.f32.mxu0 0.0
          %1447 = vmatmul.mubr.f32.gmra.mxu0 %v1310
          %v1448 = vpop.f32.mrf.mxu0
          %v1449 = vadd.f32 0.0, %v1448
          %v1450 = vpop.f32.mrf.mxu0
          %1451 = vmatprep.mubr.f32.mxu0 0.0
          %1452 = vmatmul.mubr.f32.gmra.mxu0 %v1313
          %v1453 = vpop.f32.mrf.mxu0
          %v1454 = vadd.f32 0.0, %v1453
          %v1455 = vpop.f32.mrf.mxu0
          %1456 = vmatprep.mubr.f32.mxu0 0.0
          %1457 = vmatmul.mubr.f32.gmra.mxu0 %v1316
          %v1458 = vpop.f32.mrf.mxu0
          %v1459 = vadd.f32 0.0, %v1458
          %v1460 = vpop.f32.mrf.mxu0
          %1461 = vmatprep.mubr.f32.mxu0 0.0
          %1462 = vmatmul.mubr.f32.gmra.mxu0 %v1319
          %v1463 = vpop.f32.mrf.mxu0
          %v1464 = vadd.f32 0.0, %v1463
          %v1465 = vpop.f32.mrf.mxu0
          %1466 = vmatprep.mubr.f32.mxu0 0.0
          %1467 = vmatmul.mubr.f32.gmra.mxu0 %v1322
          %v1468 = vpop.f32.mrf.mxu0
          %v1469 = vadd.f32 0.0, %v1468
          %v1470 = vpop.f32.mrf.mxu0
          %1471 = vdwg.mxu0
          %v1472 = vmul.f32 %v1166, %v1166
          %v1473 = vmul.f32 %v1171, %v1171
          %v1474 = vmul.f32 %v1176, %v1176
          %v1475 = vmul.f32 %v1181, %v1181
          %v1476 = vmul.f32 %v1186, %v1186
          %v1477 = vmul.f32 %v1191, %v1191
          %v1478 = vmul.f32 %v1196, %v1196
          %v1479 = vmul.f32 %v1201, %v1201
          %v1480 = vmul.f32 %v1206, %v1206
          %v1481 = vmul.f32 %v1211, %v1211
          %v1482 = vmul.f32 %v1216, %v1216
          %v1483 = vmul.f32 %v1221, %v1221
          %v1484 = vmul.f32 %v1226, %v1226
          %v1485 = vmul.f32 %v1231, %v1231
          %v1486 = vmul.f32 %v1236, %v1236
          %v1487 = vmul.f32 %v1241, %v1241
          %v1488 = vadd.f32 %v1472, %v1473
          %v1489 = vadd.f32 %v1488, %v1474
          %v1490 = vadd.f32 %v1489, %v1475
          %v1491 = vadd.f32 %v1490, %v1476
          %v1492 = vadd.f32 %v1491, %v1477
          %v1493 = vadd.f32 %v1492, %v1478
          %v1494 = vadd.f32 %v1493, %v1479
          %v1495 = vadd.f32 %v1494, %v1480
          %v1496 = vadd.f32 %v1495, %v1481
          %v1497 = vadd.f32 %v1496, %v1482
          %v1498 = vadd.f32 %v1497, %v1483
          %v1499 = vadd.f32 %v1498, %v1484
          %v1500 = vadd.f32 %v1499, %v1485
          %v1501 = vadd.f32 %v1500, %v1486
          %v1502 = vadd.f32 %v1501, %v1487
          %1503 = vadd.xlane.f32.xlu0 %v1502
          %v1504 = vpop.xlane.xlu0 %1503
          %v1505 = vrot.slane %v1504, 4
          %v1506 = vadd.f32 %v1504, %v1505
          %v1507 = vrot.slane %v1506, 2
          %v1508 = vadd.f32 %v1506, %v1507
          %v1509 = vrot.slane %v1508, 1
          %v1510 = vadd.f32 %v1508, %v1509
          %s1511 = vtos %v1510
          %v1512 = vmul.f32 %v954, %v954
          %v1513 = vsel %vm987, %v1512, 0.0
          %1514 = vadd.xlane.f32.xlu0 %v1513
          %v1515 = vpop.xlane.xlu0 %1514
          %v1516 = vrot.slane %v1515, 4
          %v1517 = vadd.f32 %v1515, %v1516
          %v1518 = vrot.slane %v1517, 2
          %v1519 = vadd.f32 %v1517, %v1518
          %v1520 = vrot.slane %v1519, 1
          %v1521 = vadd.f32 %v1519, %v1520
          %s1522 = vtos %v1521
          %s1523 = ssub.f32 %s1511, %s1522
          %v1524 = vmul.f32 %v1394, %v1394
          %v1525 = vmul.f32 %v1399, %v1399
          %v1526 = vmul.f32 %v1404, %v1404
          %v1527 = vmul.f32 %v1409, %v1409
          %v1528 = vmul.f32 %v1414, %v1414
          %v1529 = vmul.f32 %v1419, %v1419
          %v1530 = vmul.f32 %v1424, %v1424
          %v1531 = vmul.f32 %v1429, %v1429
          %v1532 = vmul.f32 %v1434, %v1434
          %v1533 = vmul.f32 %v1439, %v1439
          %v1534 = vmul.f32 %v1444, %v1444
          %v1535 = vmul.f32 %v1449, %v1449
          %v1536 = vmul.f32 %v1454, %v1454
          %v1537 = vmul.f32 %v1459, %v1459
          %v1538 = vmul.f32 %v1464, %v1464
          %v1539 = vmul.f32 %v1469, %v1469
          %v1540 = vadd.f32 %v1524, %v1525
          %v1541 = vadd.f32 %v1540, %v1526
          %v1542 = vadd.f32 %v1541, %v1527
          %v1543 = vadd.f32 %v1542, %v1528
          %v1544 = vadd.f32 %v1543, %v1529
          %v1545 = vadd.f32 %v1544, %v1530
          %v1546 = vadd.f32 %v1545, %v1531
          %v1547 = vadd.f32 %v1546, %v1532
          %v1548 = vadd.f32 %v1547, %v1533
          %v1549 = vadd.f32 %v1548, %v1534
          %v1550 = vadd.f32 %v1549, %v1535
          %v1551 = vadd.f32 %v1550, %v1536
          %v1552 = vadd.f32 %v1551, %v1537
          %v1553 = vadd.f32 %v1552, %v1538
          %v1554 = vadd.f32 %v1553, %v1539
          %1555 = vadd.xlane.f32.xlu0 %v1554
          %v1556 = vpop.xlane.xlu0 %1555
          %v1557 = vrot.slane %v1556, 4
          %v1558 = vadd.f32 %v1556, %v1557
          %v1559 = vrot.slane %v1558, 2
          %v1560 = vadd.f32 %v1558, %v1559
          %v1561 = vrot.slane %v1560, 1
          %v1562 = vadd.f32 %v1560, %v1561
          %s1563 = vtos %v1562
          %v1564 = vmul.f32 %v962, %v962
          %v1565 = vsel %vm987, %v1564, 0.0
          %1566 = vadd.xlane.f32.xlu0 %v1565
          %v1567 = vpop.xlane.xlu0 %1566
          %v1568 = vrot.slane %v1567, 4
          %v1569 = vadd.f32 %v1567, %v1568
          %v1570 = vrot.slane %v1569, 2
          %v1571 = vadd.f32 %v1569, %v1570
          %v1572 = vrot.slane %v1571, 1
          %v1573 = vadd.f32 %v1571, %v1572
          %s1574 = vtos %v1573
          %s1575 = ssub.f32 %s1563, %s1574
          %s1576 = sadd.f32 %s1523, %s1575
          %v1577 = vrcp.pop 16.0
          %s1578 = vtos %v1577
          %s1579 = smul.f32 %s1576, %s1578
          %s1580 = smul.f32 %s928, 25.0
          %s1581 = smul.f32 %s1014, 25.0
          %s1582 = sadd.f32 %s1580, %s1581
          %s1583 = sadd.f32 %s1582, %s1579
          %s1584 = scalar_lea.smem [#allocation11], 0
          %1585 = sst [smem:[%s1584]] %s1583
        $region76: #{tpu_custom_call.1} parent=51 // pred_fallthru
          _
        // Predicated region
        $region77: #{tpu_custom_call.1} parent=51 // pred_check
          %p1586 = pneg %p218
        $region78: #{tpu_custom_call.1} parent=51 // pred_check_branch
          %1588 = sbr.rel (%p1586) target = $region80
        $region79: #{tpu_custom_call.1} parent=51 // pred_region
          %s1590 = ssub.s32 16, 16
          %1591 = vsyncadd [#allocation5], %s1590
          %1594 = dma.smem_to_hbm [#allocation11], 16, %s8, [#allocation5]
        $region80: #{tpu_custom_call.1} parent=51 // pred_fallthru
          _
        // Predicated region
        $region81: #{tpu_custom_call.1} parent=51 // pred_check
          %p1595 = pneg %p218
        $region82: #{tpu_custom_call.1} parent=51 // pred_check_branch
          %1597 = sbr.rel (%p1595) target = $region84
        $region83: #{tpu_custom_call.1} parent=51 // pred_region
          %1598 = dma.done [#allocation5], 16
        $region84: #{tpu_custom_call.1} parent=51 // pred_fallthru
          _
        %1599 = sfence
      $region52: #{tpu_custom_call.1} parent=5 // pred_fallthru
        _
      %p1600 = scmp.le.s32.totalorder 2, %s22
      // Predicated region
      $region85: #{tpu_custom_call.1} parent=5 // pred_check
        %p1601 = pneg %p1600
      $region86: #{tpu_custom_call.1} parent=5 // pred_check_branch
        %1603 = sbr.rel (%p1601) target = $region88
      $region87: #{tpu_custom_call.1} parent=5 // pred_region
        %s1604 = ssub.s32 %s22, 2
      $region88: #{tpu_custom_call.1} parent=5 // pred_fallthru
        _
    $region6: #{tpu_custom_call.1} parent=1 // loop_footer
      %s26 = sadd.s32 1, %s22
    $region7: #{tpu_custom_call.1} parent=1 // loop_footer_branch
      %21 = sbr.rel target = $region3
    $region8: #{tpu_custom_call.1} parent=1 // loop_exit
      _
    %1605 = vsyncpa [#allocation4], 1
    %s1606 = scalar_lea.sflag [#allocation4], 1
    %1607 = vsyncpa %s1606, 1
    %1608 = vsyncpa [#allocation7], 1
    %s1609 = scalar_lea.sflag [#allocation7], 1
    %1610 = vsyncpa %s1609, 1
    %1611 = vsyncpa [#allocation10], 1
    %1612 = vsyncpa [#allocation5], 1
    %s1613 = scalar_lea.sflag [#allocation5], 1
    %1614 = vsyncpa %s1613, 1

</llo_original>
